<compile_context>
chip_gen: v6e
topology: v6e:2x2x1
jax: 0.10.0
libtpu: 0.0.40
codegen_flags: <defaults>
</compile_context>

<pallas_src>
import math
import numpy as np
import jax
import jax.numpy as jnp
from jax import lax
from jax.experimental import pallas as pl
from jax.experimental.pallas import tpu as pltpu

# ---- model config (small, consistent with the module) ----
BATCH = 2
SEQ = 8          # T  (<= block_size)
N_EMBED = 32     # C
N_HEADS = 4
HEAD_SIZE = N_EMBED // N_HEADS
LN_EPS = 1e-5
NEG_BIG = -1e30  # finite causal-mask fill (diag is always unmasked)

# ---- packed-parameter slab layout (rows; matrices start on 8-row boundaries) ----
_C = N_EMBED
R_LN1 = 0                    # row 0,   cols 0:C
R_LN2 = 1                    # row 1,   cols 0:C
R_B1 = 2                     # row 2,   cols 0:4C
R_B2 = 3                     # row 3,   cols 0:C
R_QKV = 8                    # rows 8:40,    cols 0:3C   (scale folded into q cols)
R_WO = R_QKV + _C            # rows 40:72,   cols 0:C
R_W1 = R_WO + _C             # rows 72:104,  cols 0:4C
R_W2 = R_W1 + _C             # rows 104:232, cols 0:C
PACK_ROWS = R_W2 + 4 * _C    # 232
PACK_COLS = 4 * _C           # 128 (lane-dense)


def transformer_block_kernel(x_ref, p_ref, o_ref):
    B, T, C = x_ref.shape
    H, hs = N_HEADS, HEAD_SIZE
    BT = B * T

    x = x_ref[...].reshape(BT, C)                       # (BT, C); leading-dim merge only

    # ---------- parameter views (static slices of the packed VMEM slab) ----------
    ln1_w = p_ref[R_LN1:R_LN1 + 1, 0:C]                 # (1, C)
    ln2_w = p_ref[R_LN2:R_LN2 + 1, 0:C]                 # (1, C)
    b1 = p_ref[R_B1:R_B1 + 1, 0:4 * C]                  # (1, 4C)
    b2 = p_ref[R_B2:R_B2 + 1, 0:C]                      # (1, C)
    wqkv = p_ref[R_QKV:R_QKV + C, 0:3 * C]              # (C, 3C)
    wo = p_ref[R_WO:R_WO + C, 0:C]                      # (C, C)
    w1 = p_ref[R_W1:R_W1 + C, 0:4 * C]                  # (C, 4C)
    w2 = p_ref[R_W2:R_W2 + 4 * C, 0:C]                  # (4C, C)

    # ---------- LayerNorm 1 (no bias) ----------
    mu = jnp.mean(x, axis=-1, keepdims=True)
    xc = x - mu
    var = jnp.mean(xc * xc, axis=-1, keepdims=True)
    xn = xc * lax.rsqrt(var + LN_EPS) * ln1_w

    # ---------- Causal self-attention ----------
    # single full-width QKV projection (softmax scale pre-folded into q columns)
    qkv = jnp.dot(xn, wqkv, preferred_element_type=jnp.float32)      # (BT, 3C)

    def split_heads(z):                                               # (BT, C) -> (B*H, T, hs)
        return z.reshape(B, T, H, hs).transpose(0, 2, 1, 3).reshape(B * H, T, hs)

    q = split_heads(qkv[:, 0:C])
    k = split_heads(qkv[:, C:2 * C])
    v = split_heads(qkv[:, 2 * C:3 * C])

    s = jnp.einsum('gqd,gkd->gqk', q, k,
                   preferred_element_type=jnp.float32)               # (B*H, T, T)
    row = lax.broadcasted_iota(jnp.int32, (T, T), 0)
    col = lax.broadcasted_iota(jnp.int32, (T, T), 1)
    s = jnp.where((row >= col)[None], s, NEG_BIG)

    s = s - jnp.max(s, axis=-1, keepdims=True)
    p = jnp.exp(s)
    p = p / jnp.sum(p, axis=-1, keepdims=True)

    o = jnp.einsum('gqk,gkd->gqd', p, v,
                   preferred_element_type=jnp.float32)               # (B*H, T, hs)
    o = o.reshape(B, H, T, hs).transpose(0, 2, 1, 3).reshape(BT, C)  # head-concat

    att = jnp.dot(o, wo, preferred_element_type=jnp.float32)         # (BT, C)
    x1 = x + att                                                     # residual 1

    # ---------- LayerNorm 2 (no bias) ----------
    mu2 = jnp.mean(x1, axis=-1, keepdims=True)
    x1c = x1 - mu2
    var2 = jnp.mean(x1c * x1c, axis=-1, keepdims=True)
    x1n = x1c * lax.rsqrt(var2 + LN_EPS) * ln2_w

    # ---------- FeedForward: Linear -> exact GELU -> Linear ----------
    h1 = jnp.dot(x1n, w1, preferred_element_type=jnp.float32) + b1
    h1 = 0.5 * h1 * (1.0 + lax.erf(h1 * (1.0 / math.sqrt(2.0))))     # torch-default exact GELU
    ff = jnp.dot(h1, w2, preferred_element_type=jnp.float32) + b2

    o_ref[...] = (x1 + ff).reshape(B, T, C)                          # residual 2


def pack_params(params):
    """Pack all block parameters into a single lane-dense (232, 128) f32 slab."""
    ln1_w, wqkv, wo, ln2_w, w1, b1, w2, b2 = params
    C = N_EMBED
    # fold 1/sqrt(head_size) softmax scale into the q columns of the fused QKV weight
    wqkv = wqkv.at[:, 0:C].multiply(1.0 / math.sqrt(HEAD_SIZE))

    P = jnp.zeros((PACK_ROWS, PACK_COLS), jnp.float32)
    P = P.at[R_LN1, 0:C].set(ln1_w[0])
    P = P.at[R_LN2, 0:C].set(ln2_w[0])
    P = P.at[R_B1, 0:4 * C].set(b1[0])
    P = P.at[R_B2, 0:C].set(b2[0])
    P = P.at[R_QKV:R_QKV + C, 0:3 * C].set(wqkv)
    P = P.at[R_WO:R_WO + C, 0:C].set(wo)
    P = P.at[R_W1:R_W1 + C, 0:4 * C].set(w1)
    P = P.at[R_W2:R_W2 + 4 * C, 0:C].set(w2)
    return P


def transformer_block(x, params):
    B, T, C = x.shape
    packed = pack_params(params)
    vmem = lambda: pl.BlockSpec(memory_space=pltpu.MemorySpace.VMEM)
    # Grid-less: whole (B,T,C) activation + ~116 KB packed params are VMEM-resident.
    # If B/T grow: add a "parallel" grid axis over batch/T-tiles (v7x has 2 TCs) and
    # re-budget residency against v7x's 64 MiB VMEM.
    return pl.pallas_call(
        transformer_block_kernel,
        out_shape=jax.ShapeDtypeStruct((B, T, C), x.dtype),
        in_specs=[vmem(), vmem()],
        out_specs=vmem(),
    )(x, packed)


def reference(x, params):
    """Pure-JAX reference mirroring the PyTorch forward."""
    ln1_w, wqkv, wo, ln2_w, w1, b1, w2, b2 = params
    B, T, C = x.shape

    def ln(y, w):
        mu = y.mean(-1, keepdims=True)
        var = ((y - mu) ** 2).mean(-1, keepdims=True)
        return (y - mu) / jnp.sqrt(var + LN_EPS) * w

    xn = ln(x, ln1_w[0])
    qkv = xn @ wqkv
    q, k, v = jnp.split(qkv, 3, axis=-1)
    q = q.reshape(B, T, N_HEADS, HEAD_SIZE).transpose(0, 2, 1, 3)
    k = k.reshape(B, T, N_HEADS, HEAD_SIZE).transpose(0, 2, 1, 3)
    v = v.reshape(B, T, N_HEADS, HEAD_SIZE).transpose(0, 2, 1, 3)
    s = (q @ k.transpose(0, 1, 3, 2)) / math.sqrt(HEAD_SIZE)
    mask = jnp.tril(jnp.ones((T, T), bool))
    s = jnp.where(mask, s, -jnp.inf)
    p = jax.nn.softmax(s, axis=-1)
    att = (p @ v).transpose(0, 2, 1, 3).reshape(B, T, C) @ wo
    x1 = x + att
    x1n = ln(x1, ln2_w[0])
    h = jax.nn.gelu(x1n @ w1 + b1[0], approximate=False)
    return x1 + (h @ w2 + b2[0])


def make_params(key):
    ks = jax.random.split(key, 6)
    C = N_EMBED
    scale = 0.02
    ln1_w = jnp.ones((1, C), jnp.float32)
    ln2_w = jnp.ones((1, C), jnp.float32)
    wqkv = scale * jax.random.normal(ks[0], (C, 3 * C), jnp.float32)
    wo = scale * jax.random.normal(ks[1], (C, C), jnp.float32)
    w1 = scale * jax.random.normal(ks[2], (C, 4 * C), jnp.float32)
    b1 = scale * jax.random.normal(ks[3], (1, 4 * C), jnp.float32)
    w2 = scale * jax.random.normal(ks[4], (4 * C, C), jnp.float32)
    b2 = scale * jax.random.normal(ks[5], (1, C), jnp.float32)
    return (ln1_w, wqkv, wo, ln2_w, w1, b1, w2, b2)


if __name__ == "__main__":
    key = jax.random.PRNGKey(0)
    kx, kp = jax.random.split(key)
    x = jax.random.normal(kx, (BATCH, SEQ, N_EMBED), jnp.float32)
    params = make_params(kp)

    out = jax.block_until_ready(transformer_block(x, params))
    ref = jax.block_until_ready(reference(x, params))
    np.testing.assert_allclose(np.asarray(out), np.asarray(ref), rtol=2e-4, atol=2e-4)

    print("KERNEL_OK")
</pallas_src>

<mosaic_0001>
module attributes {stable_mosaic.version = 11 : i64} {
  func.func @transformer_block_kernel(%arg0: memref<2x8x32xf32, #tpu.memory_space<vmem>>, %arg1: memref<232x128xf32, #tpu.memory_space<vmem>>, %arg2: memref<2x8x32xf32, #tpu.memory_space<vmem>>) attributes {dimension_semantics = [], scalar_prefetch = 0 : i64, scratch_operands = 0 : i64, tpu.core_type = #tpu.core_type<tc>} {
    %c0 = arith.constant 0 : index
    %c0_0 = arith.constant 0 : index
    %c0_1 = arith.constant 0 : index
    %0 = vector.load %arg0[%c0, %c0_0, %c0_1] : memref<2x8x32xf32, #tpu.memory_space<vmem>>, vector<2x8x32xf32>
    %1 = vector.shape_cast %0 : vector<2x8x32xf32> to vector<16x32xf32>
    %c0_2 = arith.constant 0 : index
    %c0_3 = arith.constant 0 : index
    %2 = vector.load %arg1[%c0_2, %c0_3] : memref<232x128xf32, #tpu.memory_space<vmem>>, vector<1x32xf32>
    %c1 = arith.constant 1 : index
    %c0_4 = arith.constant 0 : index
    %3 = vector.load %arg1[%c1, %c0_4] : memref<232x128xf32, #tpu.memory_space<vmem>>, vector<1x32xf32>
    %c2 = arith.constant 2 : index
    %c0_5 = arith.constant 0 : index
    %4 = vector.load %arg1[%c2, %c0_5] : memref<232x128xf32, #tpu.memory_space<vmem>>, vector<1x128xf32>
    %c3 = arith.constant 3 : index
    %c0_6 = arith.constant 0 : index
    %5 = vector.load %arg1[%c3, %c0_6] : memref<232x128xf32, #tpu.memory_space<vmem>>, vector<1x32xf32>
    %c8 = arith.constant 8 : index
    %c0_7 = arith.constant 0 : index
    %6 = vector.load %arg1[%c8, %c0_7] : memref<232x128xf32, #tpu.memory_space<vmem>>, vector<32x96xf32>
    %c40 = arith.constant 40 : index
    %c0_8 = arith.constant 0 : index
    %7 = vector.load %arg1[%c40, %c0_8] : memref<232x128xf32, #tpu.memory_space<vmem>>, vector<32x32xf32>
    %c72 = arith.constant 72 : index
    %c0_9 = arith.constant 0 : index
    %8 = vector.load %arg1[%c72, %c0_9] : memref<232x128xf32, #tpu.memory_space<vmem>>, vector<32x128xf32>
    %c104 = arith.constant 104 : index
    %c0_10 = arith.constant 0 : index
    %9 = vector.load %arg1[%c104, %c0_10] : memref<232x128xf32, #tpu.memory_space<vmem>>, vector<128x32xf32>
    %cst = arith.constant dense<0.000000e+00> : vector<16xf32>
    %10 = vector.multi_reduction <add>, %1, %cst [1] : vector<16x32xf32> to vector<16xf32>
    %11 = vector.shape_cast %10 : vector<16xf32> to vector<16x1xf32>
    %cst_11 = arith.constant 3.200000e+01 : f32
    %12 = vector.broadcast %cst_11 : f32 to vector<16x1xf32>
    %13 = arith.divf %11, %12 : vector<16x1xf32>
    %14 = vector.broadcast %13 : vector<16x1xf32> to vector<16x32xf32>
    %15 = arith.subf %1, %14 : vector<16x32xf32>
    %16 = arith.mulf %15, %15 : vector<16x32xf32>
    %cst_12 = arith.constant dense<0.000000e+00> : vector<16xf32>
    %17 = vector.multi_reduction <add>, %16, %cst_12 [1] : vector<16x32xf32> to vector<16xf32>
    %18 = vector.shape_cast %17 : vector<16xf32> to vector<16x1xf32>
    %cst_13 = arith.constant 3.200000e+01 : f32
    %19 = vector.broadcast %cst_13 : f32 to vector<16x1xf32>
    %20 = arith.divf %18, %19 : vector<16x1xf32>
    %cst_14 = arith.constant 9.99999974E-6 : f32
    %21 = vector.broadcast %cst_14 : f32 to vector<16x1xf32>
    %22 = arith.addf %20, %21 : vector<16x1xf32>
    %23 = math.rsqrt %22 : vector<16x1xf32>
    %24 = vector.broadcast %23 : vector<16x1xf32> to vector<16x32xf32>
    %25 = arith.mulf %15, %24 : vector<16x32xf32>
    %26 = vector.broadcast %2 : vector<1x32xf32> to vector<16x32xf32>
    %27 = arith.mulf %25, %26 : vector<16x32xf32>
    %cst_15 = arith.constant dense<0.000000e+00> : vector<16x96xf32>
    %28 = tpu.matmul %27, %6, %cst_15 {dimension_numbers = #tpu.dot_dimension_numbers<[1], [0], [0], [1], [0, 0, 1, 1], [], []>} : vector<16x32xf32>, vector<32x96xf32>, vector<16x96xf32> -> vector<16x96xf32>
    %29 = vector.extract_strided_slice %28 {offsets = [0, 0], sizes = [16, 32], strides = [1, 1]} : vector<16x96xf32> to vector<16x32xf32>
    %30 = vector.shape_cast %29 : vector<16x32xf32> to vector<2x8x4x8xf32>
    %31 = tpu.transpose %30, [0, 2, 1, 3] : vector<2x8x4x8xf32> -> vector<2x4x8x8xf32>
    %32 = vector.shape_cast %31 : vector<2x4x8x8xf32> to vector<8x8x8xf32>
    %33 = vector.extract_strided_slice %28 {offsets = [0, 32], sizes = [16, 32], strides = [1, 1]} : vector<16x96xf32> to vector<16x32xf32>
    %34 = vector.shape_cast %33 : vector<16x32xf32> to vector<2x8x4x8xf32>
    %35 = tpu.transpose %34, [0, 2, 1, 3] : vector<2x8x4x8xf32> -> vector<2x4x8x8xf32>
    %36 = vector.shape_cast %35 : vector<2x4x8x8xf32> to vector<8x8x8xf32>
    %37 = vector.extract_strided_slice %28 {offsets = [0, 64], sizes = [16, 32], strides = [1, 1]} : vector<16x96xf32> to vector<16x32xf32>
    %38 = vector.shape_cast %37 : vector<16x32xf32> to vector<2x8x4x8xf32>
    %39 = tpu.transpose %38, [0, 2, 1, 3] : vector<2x8x4x8xf32> -> vector<2x4x8x8xf32>
    %40 = vector.shape_cast %39 : vector<2x4x8x8xf32> to vector<8x8x8xf32>
    "tpu.trace_start"() <{level = 10 : i32, message = "gqd,gkd->gqk"}> : () -> ()
    %cst_16 = arith.constant dense<0.000000e+00> : vector<8x8x8xf32>
    %41 = tpu.matmul %32, %36, %cst_16 {dimension_numbers = #tpu.dot_dimension_numbers<[2], [2], [1], [1], [0, 0, 0, 1, 1, 1], [0], [0]>} : vector<8x8x8xf32>, vector<8x8x8xf32>, vector<8x8x8xf32> -> vector<8x8x8xf32>
    "tpu.trace_stop"() : () -> ()
    %42 = tpu.iota {dimensions = array<i32: 0>} : vector<8x8xi32>
    %43 = tpu.iota {dimensions = array<i32: 1>} : vector<8x8xi32>
    %44 = arith.cmpi sge, %42, %43 : vector<8x8xi32>
    %45 = vector.shape_cast %44 : vector<8x8xi1> to vector<1x8x8xi1>
    %cst_17 = arith.constant -1.000000e+30 : f32
    %46 = vector.shape_cast %45 : vector<1x8x8xi1> to vector<1x8x8xi1>
    %47 = vector.broadcast %46 : vector<1x8x8xi1> to vector<8x8x8xi1>
    %48 = vector.broadcast %cst_17 : f32 to vector<8x8x8xf32>
    %49 = arith.select %47, %41, %48 : vector<8x8x8xi1>, vector<8x8x8xf32>
    %cst_18 = arith.constant dense<0xFF800000> : vector<8x8xf32>
    %50 = vector.multi_reduction <maximumf>, %49, %cst_18 [2] : vector<8x8x8xf32> to vector<8x8xf32>
    %51 = vector.shape_cast %50 : vector<8x8xf32> to vector<8x8x1xf32>
    %52 = vector.broadcast %51 : vector<8x8x1xf32> to vector<8x8x8xf32>
    %53 = arith.subf %49, %52 : vector<8x8x8xf32>
    %54 = math.exp %53 : vector<8x8x8xf32>
    %cst_19 = arith.constant dense<0.000000e+00> : vector<8x8xf32>
    %55 = vector.multi_reduction <add>, %54, %cst_19 [2] : vector<8x8x8xf32> to vector<8x8xf32>
    %56 = vector.shape_cast %55 : vector<8x8xf32> to vector<8x8x1xf32>
    %57 = vector.broadcast %56 : vector<8x8x1xf32> to vector<8x8x8xf32>
    %58 = arith.divf %54, %57 : vector<8x8x8xf32>
    "tpu.trace_start"() <{level = 10 : i32, message = "gqk,gkd->gqd"}> : () -> ()
    %cst_20 = arith.constant dense<0.000000e+00> : vector<8x8x8xf32>
    %59 = tpu.matmul %58, %40, %cst_20 {dimension_numbers = #tpu.dot_dimension_numbers<[2], [1], [1], [2], [0, 0, 0, 1, 1, 2], [0], [0]>} : vector<8x8x8xf32>, vector<8x8x8xf32>, vector<8x8x8xf32> -> vector<8x8x8xf32>
    "tpu.trace_stop"() : () -> ()
    %60 = vector.shape_cast %59 : vector<8x8x8xf32> to vector<2x4x8x8xf32>
    %61 = tpu.transpose %60, [0, 2, 1, 3] : vector<2x4x8x8xf32> -> vector<2x8x4x8xf32>
    %62 = vector.shape_cast %61 : vector<2x8x4x8xf32> to vector<16x32xf32>
    %cst_21 = arith.constant dense<0.000000e+00> : vector<16x32xf32>
    %63 = tpu.matmul %62, %7, %cst_21 {dimension_numbers = #tpu.dot_dimension_numbers<[1], [0], [0], [1], [0, 0, 1, 1], [], []>} : vector<16x32xf32>, vector<32x32xf32>, vector<16x32xf32> -> vector<16x32xf32>
    %64 = arith.addf %1, %63 : vector<16x32xf32>
    %cst_22 = arith.constant dense<0.000000e+00> : vector<16xf32>
    %65 = vector.multi_reduction <add>, %64, %cst_22 [1] : vector<16x32xf32> to vector<16xf32>
    %66 = vector.shape_cast %65 : vector<16xf32> to vector<16x1xf32>
    %cst_23 = arith.constant 3.200000e+01 : f32
    %67 = vector.broadcast %cst_23 : f32 to vector<16x1xf32>
    %68 = arith.divf %66, %67 : vector<16x1xf32>
    %69 = vector.broadcast %68 : vector<16x1xf32> to vector<16x32xf32>
    %70 = arith.subf %64, %69 : vector<16x32xf32>
    %71 = arith.mulf %70, %70 : vector<16x32xf32>
    %cst_24 = arith.constant dense<0.000000e+00> : vector<16xf32>
    %72 = vector.multi_reduction <add>, %71, %cst_24 [1] : vector<16x32xf32> to vector<16xf32>
    %73 = vector.shape_cast %72 : vector<16xf32> to vector<16x1xf32>
    %cst_25 = arith.constant 3.200000e+01 : f32
    %74 = vector.broadcast %cst_25 : f32 to vector<16x1xf32>
    %75 = arith.divf %73, %74 : vector<16x1xf32>
    %cst_26 = arith.constant 9.99999974E-6 : f32
    %76 = vector.broadcast %cst_26 : f32 to vector<16x1xf32>
    %77 = arith.addf %75, %76 : vector<16x1xf32>
    %78 = math.rsqrt %77 : vector<16x1xf32>
    %79 = vector.broadcast %78 : vector<16x1xf32> to vector<16x32xf32>
    %80 = arith.mulf %70, %79 : vector<16x32xf32>
    %81 = vector.broadcast %3 : vector<1x32xf32> to vector<16x32xf32>
    %82 = arith.mulf %80, %81 : vector<16x32xf32>
    %cst_27 = arith.constant dense<0.000000e+00> : vector<16x128xf32>
    %83 = tpu.matmul %82, %8, %cst_27 {dimension_numbers = #tpu.dot_dimension_numbers<[1], [0], [0], [1], [0, 0, 1, 1], [], []>} : vector<16x32xf32>, vector<32x128xf32>, vector<16x128xf32> -> vector<16x128xf32>
    %84 = vector.broadcast %4 : vector<1x128xf32> to vector<16x128xf32>
    %85 = arith.addf %83, %84 : vector<16x128xf32>
    %cst_28 = arith.constant 5.000000e-01 : f32
    %86 = vector.broadcast %cst_28 : f32 to vector<16x128xf32>
    %87 = arith.mulf %86, %85 : vector<16x128xf32>
    %cst_29 = arith.constant 0.707106769 : f32
    %88 = vector.broadcast %cst_29 : f32 to vector<16x128xf32>
    %89 = arith.mulf %85, %88 : vector<16x128xf32>
    %90 = math.erf %89 : vector<16x128xf32>
    %cst_30 = arith.constant 1.000000e+00 : f32
    %91 = vector.broadcast %cst_30 : f32 to vector<16x128xf32>
    %92 = arith.addf %91, %90 : vector<16x128xf32>
    %93 = arith.mulf %87, %92 : vector<16x128xf32>
    %cst_31 = arith.constant dense<0.000000e+00> : vector<16x32xf32>
    %94 = tpu.matmul %93, %9, %cst_31 {dimension_numbers = #tpu.dot_dimension_numbers<[1], [0], [0], [1], [0, 0, 1, 1], [], []>} : vector<16x128xf32>, vector<128x32xf32>, vector<16x32xf32> -> vector<16x32xf32>
    %95 = vector.broadcast %5 : vector<1x32xf32> to vector<16x32xf32>
    %96 = arith.addf %94, %95 : vector<16x32xf32>
    %97 = arith.addf %64, %96 : vector<16x32xf32>
    %98 = vector.shape_cast %97 : vector<16x32xf32> to vector<2x8x32xf32>
    %c0_32 = arith.constant 0 : index
    %c0_33 = arith.constant 0 : index
    %c0_34 = arith.constant 0 : index
    %99 = vector.load %arg2[%c0_32, %c0_33, %c0_34] : memref<2x8x32xf32, #tpu.memory_space<vmem>>, vector<2x8x32xf32>
    tpu.vector_store %arg2[%c0_32, %c0_33, %c0_34], %98 {strides = array<i32>} : memref<2x8x32xf32, #tpu.memory_space<vmem>>, vector<2x8x32xf32>,
    return
  }
}

</mosaic_0001>

<llo_original>
// kernel: tpu_custom_call.1
$region0: #{tpu_custom_call.1}
  #allocation0 [shape = 'u32[]', space=smem, size = 0x4, offset = 0x4, fixed_abs, tag = 'smem constant byte address 0x4 - core index']
  #allocation1 [shape = 'u32[144,128]{1,0:T(1,128)}', space=vmem, size = 0x12000, scoped, tag = 'internal scratch']
  %s0 = inlined_call_operand.hbm [shape: f32[2,8,32], index: 0, kind: input, shape index: {}]
  %s1 = inlined_call_operand.hbm [shape: f32[232,128], index: 1, kind: input, shape index: {}]
  %s2 = inlined_call_operand.hbm [shape: f32[2,8,32], index: 2, kind: output, shape index: {}]
  %s3 = sld [smem:[#allocation0]]
  $region26: #{tpu_custom_call.1} parent=0
    _
  %s5 = ssub.s32 1, %s3
  %s6 = scalar_select 0, %s5, %s3
  $region1: #{tpu_custom_call.1} parent=0
    #allocation2 [shape = 'u8[8192]{0}', space=vmem, size = 0x2000, scoped, tag = 'input window, operand 0, single buffered']
    #allocation3 [shape = 's32[1]{0}', space=sflag, size = 0x4, scoped, tag = 'scoped memory for tpu_custom_call.1']
    #allocation4 [shape = 's32[1]{0}', space=sflag, size = 0x4, scoped, tag = 'scoped memory for tpu_custom_call.1']
    #allocation5 [shape = 'u8[118784]{0}', space=vmem, size = 0x1d000, scoped, tag = 'input window, operand 1, single buffered']
    #allocation6 [shape = 's32[1]{0}', space=sflag, size = 0x4, scoped, tag = 'scoped memory for tpu_custom_call.1']
    #allocation7 [shape = 'u8[8192]{0}', space=vmem, size = 0x2000, scoped, tag = 'output window, operand 0, single buffered']
    %7 = vsyncpa [#allocation3], 0
    %8 = vsyncpa [#allocation6], 0
    %9 = vsyncpa [#allocation4], 0
    // Predicated region
    $region2: #{tpu_custom_call.1} parent=1 // pred_check
      _
    $region3: #{tpu_custom_call.1} parent=1 // pred_check_branch
      %11 = sbr.rel (0) target = $region5
    $region4: #{tpu_custom_call.1} parent=1 // pred_region
      %s13 = ssub.s32 256, 256
      %14 = vsyncadd [#allocation3], %s13
      %s15 = sshll.u32 [#allocation2], 4
      %s16 = int_to_ptr.vmem [resolvable:$true] %s15
      %21 = dma.hbm_to_vmem [thread:$0]  %s0, 256, %s16, [#allocation3], 128, 128, 8
    $region5: #{tpu_custom_call.1} parent=1 // pred_fallthru
      _
    // Predicated region
    $region6: #{tpu_custom_call.1} parent=1 // pred_check
      _
    $region7: #{tpu_custom_call.1} parent=1 // pred_check_branch
      %23 = sbr.rel (0) target = $region9
    $region8: #{tpu_custom_call.1} parent=1 // pred_region
      %s25 = ssub.s32 3712, 3712
      %26 = vsyncadd [#allocation6], %s25
      %s27 = sshll.u32 [#allocation5], 4
      %s28 = int_to_ptr.vmem [resolvable:$true] %s27
      %33 = dma.hbm_to_vmem [thread:$0]  %s1, 3712, %s28, [#allocation6], 128, 128, 8
    $region9: #{tpu_custom_call.1} parent=1 // pred_fallthru
      _
    // Predicated region
    $region10: #{tpu_custom_call.1} parent=1 // pred_check
      _
    $region11: #{tpu_custom_call.1} parent=1 // pred_check_branch
      %35 = sbr.rel (0) target = $region13
    $region12: #{tpu_custom_call.1} parent=1 // pred_region
      %36 = dma.done [#allocation3], 256
    $region13: #{tpu_custom_call.1} parent=1 // pred_fallthru
      _
    // Predicated region
    $region14: #{tpu_custom_call.1} parent=1 // pred_check
      _
    $region15: #{tpu_custom_call.1} parent=1 // pred_check_branch
      %38 = sbr.rel (0) target = $region17
    $region16: #{tpu_custom_call.1} parent=1 // pred_region
      %39 = dma.done [#allocation6], 3712
    $region17: #{tpu_custom_call.1} parent=1 // pred_fallthru
      _
    %v40 = vld [vmem:[#allocation2] sm:$0xff]
    %v41 = vld [vmem:[#allocation2 + $0x8] sm:$0xff]
    %v42 = vld [vmem:[#allocation5] sm:$0x1]
    %v43 = vld [vmem:[#allocation5 + $0x1] sm:$0x1]
    %v44 = vld [vmem:[#allocation5 + $0x2] sm:$0x1]
    %v45 = vld [vmem:[#allocation5 + $0x3] sm:$0x1]
    %v46 = vld [vmem:[#allocation5 + $0x8] sm:$0xff]
    %v47 = vld [vmem:[#allocation5 + $0x10] sm:$0xff]
    %v48 = vld [vmem:[#allocation5 + $0x18] sm:$0xff]
    %v49 = vld [vmem:[#allocation5 + $0x20] sm:$0xff]
    %v50 = vld [vmem:[#allocation5 + $0x28] sm:$0xff]
    %v51 = vld [vmem:[#allocation5 + $0x30] sm:$0xff]
    %v52 = vld [vmem:[#allocation5 + $0x38] sm:$0xff]
    %v53 = vld [vmem:[#allocation5 + $0x40] sm:$0xff]
    %v54 = vld [vmem:[#allocation5 + $0x48] sm:$0xff]
    %v55 = vld [vmem:[#allocation5 + $0x50] sm:$0xff]
    %v56 = vld [vmem:[#allocation5 + $0x58] sm:$0xff]
    %v57 = vld [vmem:[#allocation5 + $0x60] sm:$0xff]
    %v58 = vld [vmem:[#allocation5 + $0x68] sm:$0xff]
    %v59 = vld [vmem:[#allocation5 + $0x70] sm:$0xff]
    %v60 = vld [vmem:[#allocation5 + $0x78] sm:$0xff]
    %v61 = vld [vmem:[#allocation5 + $0x80] sm:$0xff]
    %v62 = vld [vmem:[#allocation5 + $0x88] sm:$0xff]
    %v63 = vld [vmem:[#allocation5 + $0x90] sm:$0xff]
    %v64 = vld [vmem:[#allocation5 + $0x98] sm:$0xff]
    %v65 = vld [vmem:[#allocation5 + $0xa0] sm:$0xff]
    %v66 = vld [vmem:[#allocation5 + $0xa8] sm:$0xff]
    %v67 = vld [vmem:[#allocation5 + $0xb0] sm:$0xff]
    %v68 = vld [vmem:[#allocation5 + $0xb8] sm:$0xff]
    %v69 = vld [vmem:[#allocation5 + $0xc0] sm:$0xff]
    %v70 = vld [vmem:[#allocation5 + $0xc8] sm:$0xff]
    %v71 = vld [vmem:[#allocation5 + $0xd0] sm:$0xff]
    %v72 = vld [vmem:[#allocation5 + $0xd8] sm:$0xff]
    %v73 = vld [vmem:[#allocation5 + $0xe0] sm:$0xff]
    %vm74 = vcmask 261120
    %v75 = vsel %vm74, %v40, 0.0
    %76 = vadd.xlane.f32.xlu0 %v75
    %v77 = vpop.xlane.xlu0 %76
    %v78 = vsel %vm74, %v41, 0.0
    %79 = vadd.xlane.f32.xlu0 %v78
    %v80 = vpop.xlane.xlu0 %79
    %v81 = vrcp.pop 32.0
    %v82 = vmul.f32 %v77, %v81
    %v83 = vmul.f32 %v80, %v81
    %v84 = vsub.f32 %v40, %v82
    %v85 = vsub.f32 %v41, %v83
    %v86 = vmul.f32 %v84, %v84
    %v87 = vmul.f32 %v85, %v85
    %v88 = vsel %vm74, %v86, 0.0
    %89 = vadd.xlane.f32.xlu0 %v88
    %v90 = vpop.xlane.xlu0 %89
    %v91 = vsel %vm74, %v87, 0.0
    %92 = vadd.xlane.f32.xlu0 %v91
    %v93 = vpop.xlane.xlu0 %92
    %v94 = vmul.f32 %v90, %v81
    %v95 = vmul.f32 %v93, %v81
    %v96 = vadd.f32 %v94, 1e-05
    %v97 = vadd.f32 %v95, 1e-05
    %v98 = vrsqrt.pop %v96
    %v99 = vrsqrt.pop %v97
    %v100 = vmul.f32 %v84, %v98
    %v101 = vmul.f32 %v85, %v99
    %v102 = vlaneseq
    %v103 = vshrl.u32 %v102, 7
    %v104 = vsub.s32 0, %v103
    %v105 = vrot.slane %v42, %v104
    %v106 = vmul.f32 %v100, %v105
    %v107 = vmul.f32 %v101, %v105
    %v109 = vsel %vm74, %v106, 0
    %v112 = vsel %vm74, %v107, 0
    %114 = vmatprep.subr.mxu0 0.0
    %115 = vmatpush1.msra.mxu0 0.0
    %116 = vmatprep.subr.mxu0 0.0
    %117 = vmatpush1.msra.mxu0 0.0
    %118 = vmatprep.subr.mxu0 0.0
    %119 = vmatpush1.msra.mxu0 0.0
    %120 = vmatprep.subr.mxu0 0.0
    %121 = vmatpush1.msra.mxu0 0.0
    %122 = vmatprep.subr.mxu0 0.0
    %123 = vmatpush1.msra.mxu0 0.0
    %124 = vmatprep.subr.mxu0 0.0
    %125 = vmatpush1.msra.mxu0 0.0
    %126 = vmatprep.subr.mxu0 0.0
    %127 = vmatpush1.msra.mxu0 0.0
    %128 = vmatprep.subr.mxu0 0.0
    %129 = vmatpush1.msra.mxu0 0.0
    %130 = vmatprep.subr.mxu0 0.0
    %131 = vmatpush1.msra.mxu0 0.0
    %132 = vmatprep.subr.mxu0 0.0
    %133 = vmatpush1.msra.mxu0 0.0
    %134 = vmatprep.subr.mxu0 0.0
    %135 = vmatpush1.msra.mxu0 0.0
    %136 = vmatprep.subr.mxu0 0.0
    %137 = vmatpush1.msra.mxu0 0.0
    %138 = vmatprep.subr.mxu0 0.0
    %139 = vmatpush1.msra.mxu0 %v49
    %140 = vmatprep.subr.mxu0 0.0
    %141 = vmatpush1.msra.mxu0 %v48
    %142 = vmatprep.subr.mxu0 0.0
    %143 = vmatpush1.msra.mxu0 %v47
    %144 = vmatprep.subr.mxu0 0.0
    %145 = vmatpush1.msra.mxu0 %v46
    %146 = vmatprep.subr.mxu0 0.0
    %147 = vmatpush2.msra.mxu0 0.0
    %148 = vmatprep.subr.mxu0 0.0
    %149 = vmatpush2.msra.mxu0 0.0
    %150 = vmatprep.subr.mxu0 0.0
    %151 = vmatpush2.msra.mxu0 0.0
    %152 = vmatprep.subr.mxu0 0.0
    %153 = vmatpush2.msra.mxu0 0.0
    %154 = vmatprep.subr.mxu0 0.0
    %155 = vmatpush2.msra.mxu0 0.0
    %156 = vmatprep.subr.mxu0 0.0
    %157 = vmatpush2.msra.mxu0 0.0
    %158 = vmatprep.subr.mxu0 0.0
    %159 = vmatpush2.msra.mxu0 0.0
    %160 = vmatprep.subr.mxu0 0.0
    %161 = vmatpush2.msra.mxu0 0.0
    %162 = vmatprep.subr.mxu0 0.0
    %163 = vmatpush2.msra.mxu0 0.0
    %164 = vmatprep.subr.mxu0 0.0
    %165 = vmatpush2.msra.mxu0 0.0
    %166 = vmatprep.subr.mxu0 0.0
    %167 = vmatpush2.msra.mxu0 0.0
    %168 = vmatprep.subr.mxu0 0.0
    %169 = vmatpush2.msra.mxu0 0.0
    %170 = vmatprep.subr.mxu0 0.0
    %171 = vmatpush2.msra.mxu0 0.0
    %172 = vmatprep.subr.mxu0 0.0
    %173 = vmatpush2.msra.mxu0 0.0
    %174 = vmatprep.subr.mxu0 0.0
    %175 = vmatpush2.msra.mxu0 0.0
    %176 = vmatprep.subr.mxu0 0.0
    %177 = vmatpush2.msra.mxu0 0.0
    %178 = vmatprep.mubr.f32.mxu0 0.0
    %179 = vmatmul.mubr.f32.gmra.mxu0 %v109
    %v180 = vpop.f32.mrf.mxu0
    %v181 = vadd.f32 0.0, %v180
    %v182 = vpop.f32.mrf.mxu0
    %183 = vmatprep.mubr.f32.mxu0 0.0
    %184 = vmatmul.mubr.f32.gmra.mxu0 %v112
    %v185 = vpop.f32.mrf.mxu0
    %v186 = vadd.f32 0.0, %v185
    %v187 = vpop.f32.mrf.mxu0
    %188 = vdwg.mxu0
    %191 = vrot.lane.b32.xlu0 %v181, 120
    %v192 = vpop.permute.xlu0 %191
    %193 = vrot.lane.b32.xlu0 %v186, 120
    %v194 = vpop.permute.xlu0 %193
    %197 = vrot.lane.b32.xlu0 %v181, 112
    %v198 = vpop.permute.xlu0 %197
    %199 = vrot.lane.b32.xlu0 %v186, 112
    %v200 = vpop.permute.xlu0 %199
    %203 = vrot.lane.b32.xlu0 %v181, 104
    %v204 = vpop.permute.xlu0 %203
    %205 = vrot.lane.b32.xlu0 %v186, 104
    %v206 = vpop.permute.xlu0 %205
    %v209 = vcombine.low %v181, %v198
    %v210 = vcombine.high %v181, %v198
    %v212 = vunpack.c.l.s4 1983009808
    %v213 = vunpack.c.0.s8 %v212
    %v214 = vlaneseq
    %v215 = vshrl.u32 %v214, 7
    %v216 = vsub.s32 %v213, %v215
    %v217 = vrot.slane %v209, %v216
    %v219 = vunpack.c.l.s4 1983009808
    %v220 = vunpack.c.0.s8 %v219
    %v221 = vlaneseq
    %v222 = vshrl.u32 %v221, 7
    %v223 = vsub.s32 %v220, %v222
    %v224 = vrot.slane %v210, %v223
    %v225 = vcombine.low %v192, %v204
    %v226 = vcombine.high %v192, %v204
    %v228 = vunpack.c.l.s4 1983009808
    %v229 = vunpack.c.0.s8 %v228
    %v230 = vlaneseq
    %v231 = vshrl.u32 %v230, 7
    %v232 = vsub.s32 %v229, %v231
    %v233 = vrot.slane %v225, %v232
    %v235 = vunpack.c.l.s4 1983009808
    %v236 = vunpack.c.0.s8 %v235
    %v237 = vlaneseq
    %v238 = vshrl.u32 %v237, 7
    %v239 = vsub.s32 %v236, %v238
    %v240 = vrot.slane %v226, %v239
    %v241 = vcombine.low %v217, %v233
    %v242 = vcombine.high %v217, %v233
    %v244 = vunpack.c.l.s4 1934713408
    %v245 = vunpack.c.0.s8 %v244
    %v246 = vlaneseq
    %v247 = vshrl.u32 %v246, 7
    %v248 = vsub.s32 %v245, %v247
    %v249 = vrot.slane %v241, %v248
    %v251 = vunpack.c.l.s4 1934713408
    %v252 = vunpack.c.0.s8 %v251
    %v253 = vlaneseq
    %v254 = vshrl.u32 %v253, 7
    %v255 = vsub.s32 %v252, %v254
    %v256 = vrot.slane %v242, %v255
    %v257 = vcombine.low %v224, %v240
    %v258 = vcombine.high %v224, %v240
    %v260 = vunpack.c.l.s4 1934713408
    %v261 = vunpack.c.0.s8 %v260
    %v262 = vlaneseq
    %v263 = vshrl.u32 %v262, 7
    %v264 = vsub.s32 %v261, %v263
    %v265 = vrot.slane %v257, %v264
    %v267 = vunpack.c.l.s4 1934713408
    %v268 = vunpack.c.0.s8 %v267
    %v269 = vlaneseq
    %v270 = vshrl.u32 %v269, 7
    %v271 = vsub.s32 %v268, %v270
    %v272 = vrot.slane %v258, %v271
    %v273 = vcombine.high %v249, 0.0
    %v274 = vcombine.high %v256, 0.0
    %v275 = vcombine.high %v265, 0.0
    %v276 = vcombine.high %v272, 0.0
    %v277 = vcombine.low %v186, %v200
    %v278 = vcombine.high %v186, %v200
    %v280 = vunpack.c.l.s4 1983009808
    %v281 = vunpack.c.0.s8 %v280
    %v282 = vlaneseq
    %v283 = vshrl.u32 %v282, 7
    %v284 = vsub.s32 %v281, %v283
    %v285 = vrot.slane %v277, %v284
    %v287 = vunpack.c.l.s4 1983009808
    %v288 = vunpack.c.0.s8 %v287
    %v289 = vlaneseq
    %v290 = vshrl.u32 %v289, 7
    %v291 = vsub.s32 %v288, %v290
    %v292 = vrot.slane %v278, %v291
    %v293 = vcombine.low %v194, %v206
    %v294 = vcombine.high %v194, %v206
    %v296 = vunpack.c.l.s4 1983009808
    %v297 = vunpack.c.0.s8 %v296
    %v298 = vlaneseq
    %v299 = vshrl.u32 %v298, 7
    %v300 = vsub.s32 %v297, %v299
    %v301 = vrot.slane %v293, %v300
    %v303 = vunpack.c.l.s4 1983009808
    %v304 = vunpack.c.0.s8 %v303
    %v305 = vlaneseq
    %v306 = vshrl.u32 %v305, 7
    %v307 = vsub.s32 %v304, %v306
    %v308 = vrot.slane %v294, %v307
    %v309 = vcombine.low %v285, %v301
    %v310 = vcombine.high %v285, %v301
    %v312 = vunpack.c.l.s4 1934713408
    %v313 = vunpack.c.0.s8 %v312
    %v314 = vlaneseq
    %v315 = vshrl.u32 %v314, 7
    %v316 = vsub.s32 %v313, %v315
    %v317 = vrot.slane %v309, %v316
    %v319 = vunpack.c.l.s4 1934713408
    %v320 = vunpack.c.0.s8 %v319
    %v321 = vlaneseq
    %v322 = vshrl.u32 %v321, 7
    %v323 = vsub.s32 %v320, %v322
    %v324 = vrot.slane %v310, %v323
    %v325 = vcombine.low %v292, %v308
    %v326 = vcombine.high %v292, %v308
    %v328 = vunpack.c.l.s4 1934713408
    %v329 = vunpack.c.0.s8 %v328
    %v330 = vlaneseq
    %v331 = vshrl.u32 %v330, 7
    %v332 = vsub.s32 %v329, %v331
    %v333 = vrot.slane %v325, %v332
    %v335 = vunpack.c.l.s4 1934713408
    %v336 = vunpack.c.0.s8 %v335
    %v337 = vlaneseq
    %v338 = vshrl.u32 %v337, 7
    %v339 = vsub.s32 %v336, %v338
    %v340 = vrot.slane %v326, %v339
    %v341 = vcombine.high %v317, 0.0
    %v342 = vcombine.high %v324, 0.0
    %v343 = vcombine.high %v333, 0.0
    %v344 = vcombine.high %v340, 0.0
    %v345 = vcombine.low %v249, %v256
    %v347 = vunpack.c.l.s4 1983009808
    %v348 = vunpack.c.0.s8 %v347
    %v349 = vlaneseq
    %v350 = vshrl.u32 %v349, 7
    %v351 = vsub.s32 %v348, %v350
    %v352 = vrot.slane %v345, %v351
    %v353 = vcombine.low %v273, %v274
    %v355 = vunpack.c.l.s4 1983009808
    %v356 = vunpack.c.0.s8 %v355
    %v357 = vlaneseq
    %v358 = vshrl.u32 %v357, 7
    %v359 = vsub.s32 %v356, %v358
    %v360 = vrot.slane %v353, %v359
    %v361 = vcombine.low %v265, %v272
    %v363 = vunpack.c.l.s4 1983009808
    %v364 = vunpack.c.0.s8 %v363
    %v365 = vlaneseq
    %v366 = vshrl.u32 %v365, 7
    %v367 = vsub.s32 %v364, %v366
    %v368 = vrot.slane %v361, %v367
    %v369 = vcombine.low %v275, %v276
    %v371 = vunpack.c.l.s4 1983009808
    %v372 = vunpack.c.0.s8 %v371
    %v373 = vlaneseq
    %v374 = vshrl.u32 %v373, 7
    %v375 = vsub.s32 %v372, %v374
    %v376 = vrot.slane %v369, %v375
    %v377 = vcombine.low %v352, %v360
    %v378 = vcombine.high %v352, %v360
    %v380 = vunpack.c.l.s4 1934713408
    %v381 = vunpack.c.0.s8 %v380
    %v382 = vlaneseq
    %v383 = vshrl.u32 %v382, 7
    %v384 = vsub.s32 %v381, %v383
    %v385 = vrot.slane %v377, %v384
    %v387 = vunpack.c.l.s4 1934713408
    %v388 = vunpack.c.0.s8 %v387
    %v389 = vlaneseq
    %v390 = vshrl.u32 %v389, 7
    %v391 = vsub.s32 %v388, %v390
    %v392 = vrot.slane %v378, %v391
    %v393 = vcombine.low %v368, %v376
    %v394 = vcombine.high %v368, %v376
    %v396 = vunpack.c.l.s4 1934713408
    %v397 = vunpack.c.0.s8 %v396
    %v398 = vlaneseq
    %v399 = vshrl.u32 %v398, 7
    %v400 = vsub.s32 %v397, %v399
    %v401 = vrot.slane %v393, %v400
    %v403 = vunpack.c.l.s4 1934713408
    %v404 = vunpack.c.0.s8 %v403
    %v405 = vlaneseq
    %v406 = vshrl.u32 %v405, 7
    %v407 = vsub.s32 %v404, %v406
    %v408 = vrot.slane %v394, %v407
    %v409 = vcombine.low %v385, %v401
    %v410 = vcombine.high %v385, %v401
    %v411 = vcombine.low %v392, %v408
    %v412 = vcombine.high %v392, %v408
    %v413 = vcombine.low %v317, %v324
    %v415 = vunpack.c.l.s4 1983009808
    %v416 = vunpack.c.0.s8 %v415
    %v417 = vlaneseq
    %v418 = vshrl.u32 %v417, 7
    %v419 = vsub.s32 %v416, %v418
    %v420 = vrot.slane %v413, %v419
    %v421 = vcombine.low %v341, %v342
    %v423 = vunpack.c.l.s4 1983009808
    %v424 = vunpack.c.0.s8 %v423
    %v425 = vlaneseq
    %v426 = vshrl.u32 %v425, 7
    %v427 = vsub.s32 %v424, %v426
    %v428 = vrot.slane %v421, %v427
    %v429 = vcombine.low %v333, %v340
    %v431 = vunpack.c.l.s4 1983009808
    %v432 = vunpack.c.0.s8 %v431
    %v433 = vlaneseq
    %v434 = vshrl.u32 %v433, 7
    %v435 = vsub.s32 %v432, %v434
    %v436 = vrot.slane %v429, %v435
    %v437 = vcombine.low %v343, %v344
    %v439 = vunpack.c.l.s4 1983009808
    %v440 = vunpack.c.0.s8 %v439
    %v441 = vlaneseq
    %v442 = vshrl.u32 %v441, 7
    %v443 = vsub.s32 %v440, %v442
    %v444 = vrot.slane %v437, %v443
    %v445 = vcombine.low %v420, %v428
    %v446 = vcombine.high %v420, %v428
    %v448 = vunpack.c.l.s4 1934713408
    %v449 = vunpack.c.0.s8 %v448
    %v450 = vlaneseq
    %v451 = vshrl.u32 %v450, 7
    %v452 = vsub.s32 %v449, %v451
    %v453 = vrot.slane %v445, %v452
    %v455 = vunpack.c.l.s4 1934713408
    %v456 = vunpack.c.0.s8 %v455
    %v457 = vlaneseq
    %v458 = vshrl.u32 %v457, 7
    %v459 = vsub.s32 %v456, %v458
    %v460 = vrot.slane %v446, %v459
    %v461 = vcombine.low %v436, %v444
    %v462 = vcombine.high %v436, %v444
    %v464 = vunpack.c.l.s4 1934713408
    %v465 = vunpack.c.0.s8 %v464
    %v466 = vlaneseq
    %v467 = vshrl.u32 %v466, 7
    %v468 = vsub.s32 %v465, %v467
    %v469 = vrot.slane %v461, %v468
    %v471 = vunpack.c.l.s4 1934713408
    %v472 = vunpack.c.0.s8 %v471
    %v473 = vlaneseq
    %v474 = vshrl.u32 %v473, 7
    %v475 = vsub.s32 %v472, %v474
    %v476 = vrot.slane %v462, %v475
    %v477 = vcombine.low %v453, %v469
    %v478 = vcombine.high %v453, %v469
    %v479 = vcombine.low %v460, %v476
    %v480 = vcombine.high %v460, %v476
    %481 = vrot.lane.b32.xlu0 %v181, 96
    %v482 = vpop.permute.xlu0 %481
    %483 = vrot.lane.b32.xlu0 %v186, 96
    %v484 = vpop.permute.xlu0 %483
    %485 = vrot.lane.b32.xlu0 %v192, 96
    %v486 = vpop.permute.xlu0 %485
    %487 = vrot.lane.b32.xlu0 %v194, 96
    %v488 = vpop.permute.xlu0 %487
    %489 = vrot.lane.b32.xlu0 %v198, 96
    %v490 = vpop.permute.xlu0 %489
    %491 = vrot.lane.b32.xlu0 %v200, 96
    %v492 = vpop.permute.xlu0 %491
    %493 = vrot.lane.b32.xlu0 %v204, 96
    %v494 = vpop.permute.xlu0 %493
    %495 = vrot.lane.b32.xlu0 %v206, 96
    %v496 = vpop.permute.xlu0 %495
    %v505 = vcombine.low %v482, %v490
    %v506 = vcombine.high %v482, %v490
    %v508 = vunpack.c.l.s4 1983009808
    %v509 = vunpack.c.0.s8 %v508
    %v510 = vlaneseq
    %v511 = vshrl.u32 %v510, 7
    %v512 = vsub.s32 %v509, %v511
    %v513 = vrot.slane %v505, %v512
    %v515 = vunpack.c.l.s4 1983009808
    %v516 = vunpack.c.0.s8 %v515
    %v517 = vlaneseq
    %v518 = vshrl.u32 %v517, 7
    %v519 = vsub.s32 %v516, %v518
    %v520 = vrot.slane %v506, %v519
    %v521 = vcombine.low %v486, %v494
    %v522 = vcombine.high %v486, %v494
    %v524 = vunpack.c.l.s4 1983009808
    %v525 = vunpack.c.0.s8 %v524
    %v526 = vlaneseq
    %v527 = vshrl.u32 %v526, 7
    %v528 = vsub.s32 %v525, %v527
    %v529 = vrot.slane %v521, %v528
    %v531 = vunpack.c.l.s4 1983009808
    %v532 = vunpack.c.0.s8 %v531
    %v533 = vlaneseq
    %v534 = vshrl.u32 %v533, 7
    %v535 = vsub.s32 %v532, %v534
    %v536 = vrot.slane %v522, %v535
    %v537 = vcombine.low %v513, %v529
    %v538 = vcombine.high %v513, %v529
    %v540 = vunpack.c.l.s4 1934713408
    %v541 = vunpack.c.0.s8 %v540
    %v542 = vlaneseq
    %v543 = vshrl.u32 %v542, 7
    %v544 = vsub.s32 %v541, %v543
    %v545 = vrot.slane %v537, %v544
    %v547 = vunpack.c.l.s4 1934713408
    %v548 = vunpack.c.0.s8 %v547
    %v549 = vlaneseq
    %v550 = vshrl.u32 %v549, 7
    %v551 = vsub.s32 %v548, %v550
    %v552 = vrot.slane %v538, %v551
    %v553 = vcombine.low %v520, %v536
    %v554 = vcombine.high %v520, %v536
    %v556 = vunpack.c.l.s4 1934713408
    %v557 = vunpack.c.0.s8 %v556
    %v558 = vlaneseq
    %v559 = vshrl.u32 %v558, 7
    %v560 = vsub.s32 %v557, %v559
    %v561 = vrot.slane %v553, %v560
    %v563 = vunpack.c.l.s4 1934713408
    %v564 = vunpack.c.0.s8 %v563
    %v565 = vlaneseq
    %v566 = vshrl.u32 %v565, 7
    %v567 = vsub.s32 %v564, %v566
    %v568 = vrot.slane %v554, %v567
    %v569 = vcombine.high %v545, 0.0
    %v570 = vcombine.high %v552, 0.0
    %v571 = vcombine.high %v561, 0.0
    %v572 = vcombine.high %v568, 0.0
    %v573 = vcombine.low %v484, %v492
    %v574 = vcombine.high %v484, %v492
    %v576 = vunpack.c.l.s4 1983009808
    %v577 = vunpack.c.0.s8 %v576
    %v578 = vlaneseq
    %v579 = vshrl.u32 %v578, 7
    %v580 = vsub.s32 %v577, %v579
    %v581 = vrot.slane %v573, %v580
    %v583 = vunpack.c.l.s4 1983009808
    %v584 = vunpack.c.0.s8 %v583
    %v585 = vlaneseq
    %v586 = vshrl.u32 %v585, 7
    %v587 = vsub.s32 %v584, %v586
    %v588 = vrot.slane %v574, %v587
    %v589 = vcombine.low %v488, %v496
    %v590 = vcombine.high %v488, %v496
    %v592 = vunpack.c.l.s4 1983009808
    %v593 = vunpack.c.0.s8 %v592
    %v594 = vlaneseq
    %v595 = vshrl.u32 %v594, 7
    %v596 = vsub.s32 %v593, %v595
    %v597 = vrot.slane %v589, %v596
    %v599 = vunpack.c.l.s4 1983009808
    %v600 = vunpack.c.0.s8 %v599
    %v601 = vlaneseq
    %v602 = vshrl.u32 %v601, 7
    %v603 = vsub.s32 %v600, %v602
    %v604 = vrot.slane %v590, %v603
    %v605 = vcombine.low %v581, %v597
    %v606 = vcombine.high %v581, %v597
    %v608 = vunpack.c.l.s4 1934713408
    %v609 = vunpack.c.0.s8 %v608
    %v610 = vlaneseq
    %v611 = vshrl.u32 %v610, 7
    %v612 = vsub.s32 %v609, %v611
    %v613 = vrot.slane %v605, %v612
    %v615 = vunpack.c.l.s4 1934713408
    %v616 = vunpack.c.0.s8 %v615
    %v617 = vlaneseq
    %v618 = vshrl.u32 %v617, 7
    %v619 = vsub.s32 %v616, %v618
    %v620 = vrot.slane %v606, %v619
    %v621 = vcombine.low %v588, %v604
    %v622 = vcombine.high %v588, %v604
    %v624 = vunpack.c.l.s4 1934713408
    %v625 = vunpack.c.0.s8 %v624
    %v626 = vlaneseq
    %v627 = vshrl.u32 %v626, 7
    %v628 = vsub.s32 %v625, %v627
    %v629 = vrot.slane %v621, %v628
    %v631 = vunpack.c.l.s4 1934713408
    %v632 = vunpack.c.0.s8 %v631
    %v633 = vlaneseq
    %v634 = vshrl.u32 %v633, 7
    %v635 = vsub.s32 %v632, %v634
    %v636 = vrot.slane %v622, %v635
    %v637 = vcombine.high %v613, 0.0
    %v638 = vcombine.high %v620, 0.0
    %v639 = vcombine.high %v629, 0.0
    %v640 = vcombine.high %v636, 0.0
    %v641 = vcombine.low %v545, %v552
    %v643 = vunpack.c.l.s4 1983009808
    %v644 = vunpack.c.0.s8 %v643
    %v645 = vlaneseq
    %v646 = vshrl.u32 %v645, 7
    %v647 = vsub.s32 %v644, %v646
    %v648 = vrot.slane %v641, %v647
    %v649 = vcombine.low %v569, %v570
    %v651 = vunpack.c.l.s4 1983009808
    %v652 = vunpack.c.0.s8 %v651
    %v653 = vlaneseq
    %v654 = vshrl.u32 %v653, 7
    %v655 = vsub.s32 %v652, %v654
    %v656 = vrot.slane %v649, %v655
    %v657 = vcombine.low %v561, %v568
    %v659 = vunpack.c.l.s4 1983009808
    %v660 = vunpack.c.0.s8 %v659
    %v661 = vlaneseq
    %v662 = vshrl.u32 %v661, 7
    %v663 = vsub.s32 %v660, %v662
    %v664 = vrot.slane %v657, %v663
    %v665 = vcombine.low %v571, %v572
    %v667 = vunpack.c.l.s4 1983009808
    %v668 = vunpack.c.0.s8 %v667
    %v669 = vlaneseq
    %v670 = vshrl.u32 %v669, 7
    %v671 = vsub.s32 %v668, %v670
    %v672 = vrot.slane %v665, %v671
    %v673 = vcombine.low %v648, %v656
    %v674 = vcombine.high %v648, %v656
    %v676 = vunpack.c.l.s4 1934713408
    %v677 = vunpack.c.0.s8 %v676
    %v678 = vlaneseq
    %v679 = vshrl.u32 %v678, 7
    %v680 = vsub.s32 %v677, %v679
    %v681 = vrot.slane %v673, %v680
    %v683 = vunpack.c.l.s4 1934713408
    %v684 = vunpack.c.0.s8 %v683
    %v685 = vlaneseq
    %v686 = vshrl.u32 %v685, 7
    %v687 = vsub.s32 %v684, %v686
    %v688 = vrot.slane %v674, %v687
    %v689 = vcombine.low %v664, %v672
    %v690 = vcombine.high %v664, %v672
    %v692 = vunpack.c.l.s4 1934713408
    %v693 = vunpack.c.0.s8 %v692
    %v694 = vlaneseq
    %v695 = vshrl.u32 %v694, 7
    %v696 = vsub.s32 %v693, %v695
    %v697 = vrot.slane %v689, %v696
    %v699 = vunpack.c.l.s4 1934713408
    %v700 = vunpack.c.0.s8 %v699
    %v701 = vlaneseq
    %v702 = vshrl.u32 %v701, 7
    %v703 = vsub.s32 %v700, %v702
    %v704 = vrot.slane %v690, %v703
    %v705 = vcombine.low %v681, %v697
    %v706 = vcombine.high %v681, %v697
    %v707 = vcombine.low %v688, %v704
    %v708 = vcombine.high %v688, %v704
    %v709 = vcombine.low %v613, %v620
    %v711 = vunpack.c.l.s4 1983009808
    %v712 = vunpack.c.0.s8 %v711
    %v713 = vlaneseq
    %v714 = vshrl.u32 %v713, 7
    %v715 = vsub.s32 %v712, %v714
    %v716 = vrot.slane %v709, %v715
    %v717 = vcombine.low %v637, %v638
    %v719 = vunpack.c.l.s4 1983009808
    %v720 = vunpack.c.0.s8 %v719
    %v721 = vlaneseq
    %v722 = vshrl.u32 %v721, 7
    %v723 = vsub.s32 %v720, %v722
    %v724 = vrot.slane %v717, %v723
    %v725 = vcombine.low %v629, %v636
    %v727 = vunpack.c.l.s4 1983009808
    %v728 = vunpack.c.0.s8 %v727
    %v729 = vlaneseq
    %v730 = vshrl.u32 %v729, 7
    %v731 = vsub.s32 %v728, %v730
    %v732 = vrot.slane %v725, %v731
    %v733 = vcombine.low %v639, %v640
    %v735 = vunpack.c.l.s4 1983009808
    %v736 = vunpack.c.0.s8 %v735
    %v737 = vlaneseq
    %v738 = vshrl.u32 %v737, 7
    %v739 = vsub.s32 %v736, %v738
    %v740 = vrot.slane %v733, %v739
    %v741 = vcombine.low %v716, %v724
    %v742 = vcombine.high %v716, %v724
    %v744 = vunpack.c.l.s4 1934713408
    %v745 = vunpack.c.0.s8 %v744
    %v746 = vlaneseq
    %v747 = vshrl.u32 %v746, 7
    %v748 = vsub.s32 %v745, %v747
    %v749 = vrot.slane %v741, %v748
    %v751 = vunpack.c.l.s4 1934713408
    %v752 = vunpack.c.0.s8 %v751
    %v753 = vlaneseq
    %v754 = vshrl.u32 %v753, 7
    %v755 = vsub.s32 %v752, %v754
    %v756 = vrot.slane %v742, %v755
    %v757 = vcombine.low %v732, %v740
    %v758 = vcombine.high %v732, %v740
    %v760 = vunpack.c.l.s4 1934713408
    %v761 = vunpack.c.0.s8 %v760
    %v762 = vlaneseq
    %v763 = vshrl.u32 %v762, 7
    %v764 = vsub.s32 %v761, %v763
    %v765 = vrot.slane %v757, %v764
    %v767 = vunpack.c.l.s4 1934713408
    %v768 = vunpack.c.0.s8 %v767
    %v769 = vlaneseq
    %v770 = vshrl.u32 %v769, 7
    %v771 = vsub.s32 %v768, %v770
    %v772 = vrot.slane %v758, %v771
    %v773 = vcombine.low %v749, %v765
    %v774 = vcombine.high %v749, %v765
    %v775 = vcombine.low %v756, %v772
    %v776 = vcombine.high %v756, %v772
    %777 = vrot.lane.b32.xlu0 %v181, 64
    %v778 = vpop.permute.xlu0 %777
    %779 = vrot.lane.b32.xlu0 %v186, 64
    %v780 = vpop.permute.xlu0 %779
    %781 = vrot.lane.b32.xlu0 %v192, 64
    %v782 = vpop.permute.xlu0 %781
    %783 = vrot.lane.b32.xlu0 %v194, 64
    %v784 = vpop.permute.xlu0 %783
    %785 = vrot.lane.b32.xlu0 %v198, 64
    %v786 = vpop.permute.xlu0 %785
    %787 = vrot.lane.b32.xlu0 %v200, 64
    %v788 = vpop.permute.xlu0 %787
    %789 = vrot.lane.b32.xlu0 %v204, 64
    %v790 = vpop.permute.xlu0 %789
    %791 = vrot.lane.b32.xlu0 %v206, 64
    %v792 = vpop.permute.xlu0 %791
    %v801 = vcombine.low %v778, %v786
    %v802 = vcombine.high %v778, %v786
    %v804 = vunpack.c.l.s4 1983009808
    %v805 = vunpack.c.0.s8 %v804
    %v806 = vlaneseq
    %v807 = vshrl.u32 %v806, 7
    %v808 = vsub.s32 %v805, %v807
    %v809 = vrot.slane %v801, %v808
    %v811 = vunpack.c.l.s4 1983009808
    %v812 = vunpack.c.0.s8 %v811
    %v813 = vlaneseq
    %v814 = vshrl.u32 %v813, 7
    %v815 = vsub.s32 %v812, %v814
    %v816 = vrot.slane %v802, %v815
    %v817 = vcombine.low %v782, %v790
    %v818 = vcombine.high %v782, %v790
    %v820 = vunpack.c.l.s4 1983009808
    %v821 = vunpack.c.0.s8 %v820
    %v822 = vlaneseq
    %v823 = vshrl.u32 %v822, 7
    %v824 = vsub.s32 %v821, %v823
    %v825 = vrot.slane %v817, %v824
    %v827 = vunpack.c.l.s4 1983009808
    %v828 = vunpack.c.0.s8 %v827
    %v829 = vlaneseq
    %v830 = vshrl.u32 %v829, 7
    %v831 = vsub.s32 %v828, %v830
    %v832 = vrot.slane %v818, %v831
    %v833 = vcombine.low %v809, %v825
    %v834 = vcombine.high %v809, %v825
    %v836 = vunpack.c.l.s4 1934713408
    %v837 = vunpack.c.0.s8 %v836
    %v838 = vlaneseq
    %v839 = vshrl.u32 %v838, 7
    %v840 = vsub.s32 %v837, %v839
    %v841 = vrot.slane %v833, %v840
    %v843 = vunpack.c.l.s4 1934713408
    %v844 = vunpack.c.0.s8 %v843
    %v845 = vlaneseq
    %v846 = vshrl.u32 %v845, 7
    %v847 = vsub.s32 %v844, %v846
    %v848 = vrot.slane %v834, %v847
    %v849 = vcombine.low %v816, %v832
    %v850 = vcombine.high %v816, %v832
    %v852 = vunpack.c.l.s4 1934713408
    %v853 = vunpack.c.0.s8 %v852
    %v854 = vlaneseq
    %v855 = vshrl.u32 %v854, 7
    %v856 = vsub.s32 %v853, %v855
    %v857 = vrot.slane %v849, %v856
    %v859 = vunpack.c.l.s4 1934713408
    %v860 = vunpack.c.0.s8 %v859
    %v861 = vlaneseq
    %v862 = vshrl.u32 %v861, 7
    %v863 = vsub.s32 %v860, %v862
    %v864 = vrot.slane %v850, %v863
    %v865 = vcombine.high %v841, 0.0
    %v866 = vcombine.high %v848, 0.0
    %v867 = vcombine.high %v857, 0.0
    %v868 = vcombine.high %v864, 0.0
    %v869 = vcombine.low %v780, %v788
    %v870 = vcombine.high %v780, %v788
    %v872 = vunpack.c.l.s4 1983009808
    %v873 = vunpack.c.0.s8 %v872
    %v874 = vlaneseq
    %v875 = vshrl.u32 %v874, 7
    %v876 = vsub.s32 %v873, %v875
    %v877 = vrot.slane %v869, %v876
    %v879 = vunpack.c.l.s4 1983009808
    %v880 = vunpack.c.0.s8 %v879
    %v881 = vlaneseq
    %v882 = vshrl.u32 %v881, 7
    %v883 = vsub.s32 %v880, %v882
    %v884 = vrot.slane %v870, %v883
    %v885 = vcombine.low %v784, %v792
    %v886 = vcombine.high %v784, %v792
    %v888 = vunpack.c.l.s4 1983009808
    %v889 = vunpack.c.0.s8 %v888
    %v890 = vlaneseq
    %v891 = vshrl.u32 %v890, 7
    %v892 = vsub.s32 %v889, %v891
    %v893 = vrot.slane %v885, %v892
    %v895 = vunpack.c.l.s4 1983009808
    %v896 = vunpack.c.0.s8 %v895
    %v897 = vlaneseq
    %v898 = vshrl.u32 %v897, 7
    %v899 = vsub.s32 %v896, %v898
    %v900 = vrot.slane %v886, %v899
    %v901 = vcombine.low %v877, %v893
    %v902 = vcombine.high %v877, %v893
    %v904 = vunpack.c.l.s4 1934713408
    %v905 = vunpack.c.0.s8 %v904
    %v906 = vlaneseq
    %v907 = vshrl.u32 %v906, 7
    %v908 = vsub.s32 %v905, %v907
    %v909 = vrot.slane %v901, %v908
    %v911 = vunpack.c.l.s4 1934713408
    %v912 = vunpack.c.0.s8 %v911
    %v913 = vlaneseq
    %v914 = vshrl.u32 %v913, 7
    %v915 = vsub.s32 %v912, %v914
    %v916 = vrot.slane %v902, %v915
    %v917 = vcombine.low %v884, %v900
    %v918 = vcombine.high %v884, %v900
    %v920 = vunpack.c.l.s4 1934713408
    %v921 = vunpack.c.0.s8 %v920
    %v922 = vlaneseq
    %v923 = vshrl.u32 %v922, 7
    %v924 = vsub.s32 %v921, %v923
    %v925 = vrot.slane %v917, %v924
    %v927 = vunpack.c.l.s4 1934713408
    %v928 = vunpack.c.0.s8 %v927
    %v929 = vlaneseq
    %v930 = vshrl.u32 %v929, 7
    %v931 = vsub.s32 %v928, %v930
    %v932 = vrot.slane %v918, %v931
    %v933 = vcombine.high %v909, 0.0
    %v934 = vcombine.high %v916, 0.0
    %v935 = vcombine.high %v925, 0.0
    %v936 = vcombine.high %v932, 0.0
    %v937 = vcombine.low %v841, %v848
    %v939 = vunpack.c.l.s4 1983009808
    %v940 = vunpack.c.0.s8 %v939
    %v941 = vlaneseq
    %v942 = vshrl.u32 %v941, 7
    %v943 = vsub.s32 %v940, %v942
    %v944 = vrot.slane %v937, %v943
    %v945 = vcombine.low %v865, %v866
    %v947 = vunpack.c.l.s4 1983009808
    %v948 = vunpack.c.0.s8 %v947
    %v949 = vlaneseq
    %v950 = vshrl.u32 %v949, 7
    %v951 = vsub.s32 %v948, %v950
    %v952 = vrot.slane %v945, %v951
    %v953 = vcombine.low %v857, %v864
    %v955 = vunpack.c.l.s4 1983009808
    %v956 = vunpack.c.0.s8 %v955
    %v957 = vlaneseq
    %v958 = vshrl.u32 %v957, 7
    %v959 = vsub.s32 %v956, %v958
    %v960 = vrot.slane %v953, %v959
    %v961 = vcombine.low %v867, %v868
    %v963 = vunpack.c.l.s4 1983009808
    %v964 = vunpack.c.0.s8 %v963
    %v965 = vlaneseq
    %v966 = vshrl.u32 %v965, 7
    %v967 = vsub.s32 %v964, %v966
    %v968 = vrot.slane %v961, %v967
    %v969 = vcombine.low %v944, %v952
    %v970 = vcombine.high %v944, %v952
    %v972 = vunpack.c.l.s4 1934713408
    %v973 = vunpack.c.0.s8 %v972
    %v974 = vlaneseq
    %v975 = vshrl.u32 %v974, 7
    %v976 = vsub.s32 %v973, %v975
    %v977 = vrot.slane %v969, %v976
    %v979 = vunpack.c.l.s4 1934713408
    %v980 = vunpack.c.0.s8 %v979
    %v981 = vlaneseq
    %v982 = vshrl.u32 %v981, 7
    %v983 = vsub.s32 %v980, %v982
    %v984 = vrot.slane %v970, %v983
    %v985 = vcombine.low %v960, %v968
    %v986 = vcombine.high %v960, %v968
    %v988 = vunpack.c.l.s4 1934713408
    %v989 = vunpack.c.0.s8 %v988
    %v990 = vlaneseq
    %v991 = vshrl.u32 %v990, 7
    %v992 = vsub.s32 %v989, %v991
    %v993 = vrot.slane %v985, %v992
    %v995 = vunpack.c.l.s4 1934713408
    %v996 = vunpack.c.0.s8 %v995
    %v997 = vlaneseq
    %v998 = vshrl.u32 %v997, 7
    %v999 = vsub.s32 %v996, %v998
    %v1000 = vrot.slane %v986, %v999
    %v1001 = vcombine.low %v977, %v993
    %v1002 = vcombine.high %v977, %v993
    %v1003 = vcombine.low %v984, %v1000
    %v1004 = vcombine.high %v984, %v1000
    %v1005 = vcombine.low %v909, %v916
    %v1007 = vunpack.c.l.s4 1983009808
    %v1008 = vunpack.c.0.s8 %v1007
    %v1009 = vlaneseq
    %v1010 = vshrl.u32 %v1009, 7
    %v1011 = vsub.s32 %v1008, %v1010
    %v1012 = vrot.slane %v1005, %v1011
    %v1013 = vcombine.low %v933, %v934
    %v1015 = vunpack.c.l.s4 1983009808
    %v1016 = vunpack.c.0.s8 %v1015
    %v1017 = vlaneseq
    %v1018 = vshrl.u32 %v1017, 7
    %v1019 = vsub.s32 %v1016, %v1018
    %v1020 = vrot.slane %v1013, %v1019
    %v1021 = vcombine.low %v925, %v932
    %v1023 = vunpack.c.l.s4 1983009808
    %v1024 = vunpack.c.0.s8 %v1023
    %v1025 = vlaneseq
    %v1026 = vshrl.u32 %v1025, 7
    %v1027 = vsub.s32 %v1024, %v1026
    %v1028 = vrot.slane %v1021, %v1027
    %v1029 = vcombine.low %v935, %v936
    %v1031 = vunpack.c.l.s4 1983009808
    %v1032 = vunpack.c.0.s8 %v1031
    %v1033 = vlaneseq
    %v1034 = vshrl.u32 %v1033, 7
    %v1035 = vsub.s32 %v1032, %v1034
    %v1036 = vrot.slane %v1029, %v1035
    %v1037 = vcombine.low %v1012, %v1020
    %v1038 = vcombine.high %v1012, %v1020
    %v1040 = vunpack.c.l.s4 1934713408
    %v1041 = vunpack.c.0.s8 %v1040
    %v1042 = vlaneseq
    %v1043 = vshrl.u32 %v1042, 7
    %v1044 = vsub.s32 %v1041, %v1043
    %v1045 = vrot.slane %v1037, %v1044
    %v1047 = vunpack.c.l.s4 1934713408
    %v1048 = vunpack.c.0.s8 %v1047
    %v1049 = vlaneseq
    %v1050 = vshrl.u32 %v1049, 7
    %v1051 = vsub.s32 %v1048, %v1050
    %v1052 = vrot.slane %v1038, %v1051
    %v1053 = vcombine.low %v1028, %v1036
    %v1054 = vcombine.high %v1028, %v1036
    %v1056 = vunpack.c.l.s4 1934713408
    %v1057 = vunpack.c.0.s8 %v1056
    %v1058 = vlaneseq
    %v1059 = vshrl.u32 %v1058, 7
    %v1060 = vsub.s32 %v1057, %v1059
    %v1061 = vrot.slane %v1053, %v1060
    %v1063 = vunpack.c.l.s4 1934713408
    %v1064 = vunpack.c.0.s8 %v1063
    %v1065 = vlaneseq
    %v1066 = vshrl.u32 %v1065, 7
    %v1067 = vsub.s32 %v1064, %v1066
    %v1068 = vrot.slane %v1054, %v1067
    %v1069 = vcombine.low %v1045, %v1061
    %v1070 = vcombine.high %v1045, %v1061
    %v1071 = vcombine.low %v1052, %v1068
    %v1072 = vcombine.high %v1052, %v1068
    %vm1073 = vcmask 64512
    %v1075 = vsel %vm1073, %v409, 0
    %v1078 = vsel %vm1073, %v705, 0
    %1080 = vmatprep.subr.mxu0 0.0
    %1081 = vmatpush1.xpose.msra.mxu0 0.0
    %1082 = vmatprep.subr.mxu0 0.0
    %1083 = vmatpush1.xpose.msra.mxu0 0.0
    %1084 = vmatprep.subr.mxu0 0.0
    %1085 = vmatpush1.xpose.msra.mxu0 0.0
    %1086 = vmatprep.subr.mxu0 0.0
    %1087 = vmatpush1.xpose.msra.mxu0 0.0
    %1088 = vmatprep.subr.mxu0 0.0
    %1089 = vmatpush1.xpose.msra.mxu0 0.0
    %1090 = vmatprep.subr.mxu0 0.0
    %1091 = vmatpush1.xpose.msra.mxu0 0.0
    %1092 = vmatprep.subr.mxu0 0.0
    %1093 = vmatpush1.xpose.msra.mxu0 0.0
    %1094 = vmatprep.subr.mxu0 0.0
    %1095 = vmatpush1.xpose.msra.mxu0 0.0
    %1096 = vmatprep.subr.mxu0 0.0
    %1097 = vmatpush1.xpose.msra.mxu0 0.0
    %1098 = vmatprep.subr.mxu0 0.0
    %1099 = vmatpush1.xpose.msra.mxu0 0.0
    %1100 = vmatprep.subr.mxu0 0.0
    %1101 = vmatpush1.xpose.msra.mxu0 0.0
    %1102 = vmatprep.subr.mxu0 0.0
    %1103 = vmatpush1.xpose.msra.mxu0 0.0
    %1104 = vmatprep.subr.mxu0 0.0
    %1105 = vmatpush1.xpose.msra.mxu0 0.0
    %1106 = vmatprep.subr.mxu0 0.0
    %1107 = vmatpush1.xpose.msra.mxu0 0.0
    %1108 = vmatprep.subr.mxu0 0.0
    %1109 = vmatpush1.xpose.msra.mxu0 0.0
    %1110 = vmatprep.subr.mxu0 0.0
    %1111 = vmatpush1.xpose.msra.mxu0 %v1078
    %1112 = vmatprep.subr.mxu0 0.0
    %1113 = vmatpush2.xpose.msra.mxu0 0.0
    %1114 = vmatprep.subr.mxu0 0.0
    %1115 = vmatpush2.xpose.msra.mxu0 0.0
    %1116 = vmatprep.subr.mxu0 0.0
    %1117 = vmatpush2.xpose.msra.mxu0 0.0
    %1118 = vmatprep.subr.mxu0 0.0
    %1119 = vmatpush2.xpose.msra.mxu0 0.0
    %1120 = vmatprep.subr.mxu0 0.0
    %1121 = vmatpush2.xpose.msra.mxu0 0.0
    %1122 = vmatprep.subr.mxu0 0.0
    %1123 = vmatpush2.xpose.msra.mxu0 0.0
    %1124 = vmatprep.subr.mxu0 0.0
    %1125 = vmatpush2.xpose.msra.mxu0 0.0
    %1126 = vmatprep.subr.mxu0 0.0
    %1127 = vmatpush2.xpose.msra.mxu0 0.0
    %1128 = vmatprep.subr.mxu0 0.0
    %1129 = vmatpush2.xpose.msra.mxu0 0.0
    %1130 = vmatprep.subr.mxu0 0.0
    %1131 = vmatpush2.xpose.msra.mxu0 0.0
    %1132 = vmatprep.subr.mxu0 0.0
    %1133 = vmatpush2.xpose.msra.mxu0 0.0
    %1134 = vmatprep.subr.mxu0 0.0
    %1135 = vmatpush2.xpose.msra.mxu0 0.0
    %1136 = vmatprep.subr.mxu0 0.0
    %1137 = vmatpush2.xpose.msra.mxu0 0.0
    %1138 = vmatprep.subr.mxu0 0.0
    %1139 = vmatpush2.xpose.msra.mxu0 0.0
    %1140 = vmatprep.subr.mxu0 0.0
    %1141 = vmatpush2.xpose.msra.mxu0 0.0
    %1142 = vmatprep.subr.mxu0 0.0
    %1143 = vmatpush2.xpose.msra.mxu0 0.0
    %1144 = vmatprep.mubr.f32.mxu0 0.0
    %1145 = vmatmul.mubr.f32.gmra.mxu0 %v1075
    %v1146 = vpop.f32.mrf.mxu0
    %v1147 = vadd.f32 0.0, %v1146
    %v1148 = vpop.f32.mrf.mxu0
    %1149 = vdwg.mxu0
    %v1151 = vsel %vm1073, %v410, 0
    %v1154 = vsel %vm1073, %v706, 0
    %1156 = vmatprep.subr.mxu0 0.0
    %1157 = vmatpush1.xpose.msra.mxu0 0.0
    %1158 = vmatprep.subr.mxu0 0.0
    %1159 = vmatpush1.xpose.msra.mxu0 0.0
    %1160 = vmatprep.subr.mxu0 0.0
    %1161 = vmatpush1.xpose.msra.mxu0 0.0
    %1162 = vmatprep.subr.mxu0 0.0
    %1163 = vmatpush1.xpose.msra.mxu0 0.0
    %1164 = vmatprep.subr.mxu0 0.0
    %1165 = vmatpush1.xpose.msra.mxu0 0.0
    %1166 = vmatprep.subr.mxu0 0.0
    %1167 = vmatpush1.xpose.msra.mxu0 0.0
    %1168 = vmatprep.subr.mxu0 0.0
    %1169 = vmatpush1.xpose.msra.mxu0 0.0
    %1170 = vmatprep.subr.mxu0 0.0
    %1171 = vmatpush1.xpose.msra.mxu0 0.0
    %1172 = vmatprep.subr.mxu0 0.0
    %1173 = vmatpush1.xpose.msra.mxu0 0.0
    %1174 = vmatprep.subr.mxu0 0.0
    %1175 = vmatpush1.xpose.msra.mxu0 0.0
    %1176 = vmatprep.subr.mxu0 0.0
    %1177 = vmatpush1.xpose.msra.mxu0 0.0
    %1178 = vmatprep.subr.mxu0 0.0
    %1179 = vmatpush1.xpose.msra.mxu0 0.0
    %1180 = vmatprep.subr.mxu0 0.0
    %1181 = vmatpush1.xpose.msra.mxu0 0.0
    %1182 = vmatprep.subr.mxu0 0.0
    %1183 = vmatpush1.xpose.msra.mxu0 0.0
    %1184 = vmatprep.subr.mxu0 0.0
    %1185 = vmatpush1.xpose.msra.mxu0 0.0
    %1186 = vmatprep.subr.mxu0 0.0
    %1187 = vmatpush1.xpose.msra.mxu0 %v1154
    %1188 = vmatprep.subr.mxu0 0.0
    %1189 = vmatpush2.xpose.msra.mxu0 0.0
    %1190 = vmatprep.subr.mxu0 0.0
    %1191 = vmatpush2.xpose.msra.mxu0 0.0
    %1192 = vmatprep.subr.mxu0 0.0
    %1193 = vmatpush2.xpose.msra.mxu0 0.0
    %1194 = vmatprep.subr.mxu0 0.0
    %1195 = vmatpush2.xpose.msra.mxu0 0.0
    %1196 = vmatprep.subr.mxu0 0.0
    %1197 = vmatpush2.xpose.msra.mxu0 0.0
    %1198 = vmatprep.subr.mxu0 0.0
    %1199 = vmatpush2.xpose.msra.mxu0 0.0
    %1200 = vmatprep.subr.mxu0 0.0
    %1201 = vmatpush2.xpose.msra.mxu0 0.0
    %1202 = vmatprep.subr.mxu0 0.0
    %1203 = vmatpush2.xpose.msra.mxu0 0.0
    %1204 = vmatprep.subr.mxu0 0.0
    %1205 = vmatpush2.xpose.msra.mxu0 0.0
    %1206 = vmatprep.subr.mxu0 0.0
    %1207 = vmatpush2.xpose.msra.mxu0 0.0
    %1208 = vmatprep.subr.mxu0 0.0
    %1209 = vmatpush2.xpose.msra.mxu0 0.0
    %1210 = vmatprep.subr.mxu0 0.0
    %1211 = vmatpush2.xpose.msra.mxu0 0.0
    %1212 = vmatprep.subr.mxu0 0.0
    %1213 = vmatpush2.xpose.msra.mxu0 0.0
    %1214 = vmatprep.subr.mxu0 0.0
    %1215 = vmatpush2.xpose.msra.mxu0 0.0
    %1216 = vmatprep.subr.mxu0 0.0
    %1217 = vmatpush2.xpose.msra.mxu0 0.0
    %1218 = vmatprep.subr.mxu0 0.0
    %1219 = vmatpush2.xpose.msra.mxu0 0.0
    %1220 = vmatprep.mubr.f32.mxu0 0.0
    %1221 = vmatmul.mubr.f32.gmra.mxu0 %v1151
    %v1222 = vpop.f32.mrf.mxu0
    %v1223 = vadd.f32 0.0, %v1222
    %v1224 = vpop.f32.mrf.mxu0
    %1225 = vdwg.mxu0
    %v1227 = vsel %vm1073, %v411, 0
    %v1230 = vsel %vm1073, %v707, 0
    %1232 = vmatprep.subr.mxu0 0.0
    %1233 = vmatpush1.xpose.msra.mxu0 0.0
    %1234 = vmatprep.subr.mxu0 0.0
    %1235 = vmatpush1.xpose.msra.mxu0 0.0
    %1236 = vmatprep.subr.mxu0 0.0
    %1237 = vmatpush1.xpose.msra.mxu0 0.0
    %1238 = vmatprep.subr.mxu0 0.0
    %1239 = vmatpush1.xpose.msra.mxu0 0.0
    %1240 = vmatprep.subr.mxu0 0.0
    %1241 = vmatpush1.xpose.msra.mxu0 0.0
    %1242 = vmatprep.subr.mxu0 0.0
    %1243 = vmatpush1.xpose.msra.mxu0 0.0
    %1244 = vmatprep.subr.mxu0 0.0
    %1245 = vmatpush1.xpose.msra.mxu0 0.0
    %1246 = vmatprep.subr.mxu0 0.0
    %1247 = vmatpush1.xpose.msra.mxu0 0.0
    %1248 = vmatprep.subr.mxu0 0.0
    %1249 = vmatpush1.xpose.msra.mxu0 0.0
    %1250 = vmatprep.subr.mxu0 0.0
    %1251 = vmatpush1.xpose.msra.mxu0 0.0
    %1252 = vmatprep.subr.mxu0 0.0
    %1253 = vmatpush1.xpose.msra.mxu0 0.0
    %1254 = vmatprep.subr.mxu0 0.0
    %1255 = vmatpush1.xpose.msra.mxu0 0.0
    %1256 = vmatprep.subr.mxu0 0.0
    %1257 = vmatpush1.xpose.msra.mxu0 0.0
    %1258 = vmatprep.subr.mxu0 0.0
    %1259 = vmatpush1.xpose.msra.mxu0 0.0
    %1260 = vmatprep.subr.mxu0 0.0
    %1261 = vmatpush1.xpose.msra.mxu0 0.0
    %1262 = vmatprep.subr.mxu0 0.0
    %1263 = vmatpush1.xpose.msra.mxu0 %v1230
    %1264 = vmatprep.subr.mxu0 0.0
    %1265 = vmatpush2.xpose.msra.mxu0 0.0
    %1266 = vmatprep.subr.mxu0 0.0
    %1267 = vmatpush2.xpose.msra.mxu0 0.0
    %1268 = vmatprep.subr.mxu0 0.0
    %1269 = vmatpush2.xpose.msra.mxu0 0.0
    %1270 = vmatprep.subr.mxu0 0.0
    %1271 = vmatpush2.xpose.msra.mxu0 0.0
    %1272 = vmatprep.subr.mxu0 0.0
    %1273 = vmatpush2.xpose.msra.mxu0 0.0
    %1274 = vmatprep.subr.mxu0 0.0
    %1275 = vmatpush2.xpose.msra.mxu0 0.0
    %1276 = vmatprep.subr.mxu0 0.0
    %1277 = vmatpush2.xpose.msra.mxu0 0.0
    %1278 = vmatprep.subr.mxu0 0.0
    %1279 = vmatpush2.xpose.msra.mxu0 0.0
    %1280 = vmatprep.subr.mxu0 0.0
    %1281 = vmatpush2.xpose.msra.mxu0 0.0
    %1282 = vmatprep.subr.mxu0 0.0
    %1283 = vmatpush2.xpose.msra.mxu0 0.0
    %1284 = vmatprep.subr.mxu0 0.0
    %1285 = vmatpush2.xpose.msra.mxu0 0.0
    %1286 = vmatprep.subr.mxu0 0.0
    %1287 = vmatpush2.xpose.msra.mxu0 0.0
    %1288 = vmatprep.subr.mxu0 0.0
    %1289 = vmatpush2.xpose.msra.mxu0 0.0
    %1290 = vmatprep.subr.mxu0 0.0
    %1291 = vmatpush2.xpose.msra.mxu0 0.0
    %1292 = vmatprep.subr.mxu0 0.0
    %1293 = vmatpush2.xpose.msra.mxu0 0.0
    %1294 = vmatprep.subr.mxu0 0.0
    %1295 = vmatpush2.xpose.msra.mxu0 0.0
    %1296 = vmatprep.mubr.f32.mxu0 0.0
    %1297 = vmatmul.mubr.f32.gmra.mxu0 %v1227
    %v1298 = vpop.f32.mrf.mxu0
    %v1299 = vadd.f32 0.0, %v1298
    %v1300 = vpop.f32.mrf.mxu0
    %1301 = vdwg.mxu0
    %v1303 = vsel %vm1073, %v412, 0
    %v1306 = vsel %vm1073, %v708, 0
    %1308 = vmatprep.subr.mxu0 0.0
    %1309 = vmatpush1.xpose.msra.mxu0 0.0
    %1310 = vmatprep.subr.mxu0 0.0
    %1311 = vmatpush1.xpose.msra.mxu0 0.0
    %1312 = vmatprep.subr.mxu0 0.0
    %1313 = vmatpush1.xpose.msra.mxu0 0.0
    %1314 = vmatprep.subr.mxu0 0.0
    %1315 = vmatpush1.xpose.msra.mxu0 0.0
    %1316 = vmatprep.subr.mxu0 0.0
    %1317 = vmatpush1.xpose.msra.mxu0 0.0
    %1318 = vmatprep.subr.mxu0 0.0
    %1319 = vmatpush1.xpose.msra.mxu0 0.0
    %1320 = vmatprep.subr.mxu0 0.0
    %1321 = vmatpush1.xpose.msra.mxu0 0.0
    %1322 = vmatprep.subr.mxu0 0.0
    %1323 = vmatpush1.xpose.msra.mxu0 0.0
    %1324 = vmatprep.subr.mxu0 0.0
    %1325 = vmatpush1.xpose.msra.mxu0 0.0
    %1326 = vmatprep.subr.mxu0 0.0
    %1327 = vmatpush1.xpose.msra.mxu0 0.0
    %1328 = vmatprep.subr.mxu0 0.0
    %1329 = vmatpush1.xpose.msra.mxu0 0.0
    %1330 = vmatprep.subr.mxu0 0.0
    %1331 = vmatpush1.xpose.msra.mxu0 0.0
    %1332 = vmatprep.subr.mxu0 0.0
    %1333 = vmatpush1.xpose.msra.mxu0 0.0
    %1334 = vmatprep.subr.mxu0 0.0
    %1335 = vmatpush1.xpose.msra.mxu0 0.0
    %1336 = vmatprep.subr.mxu0 0.0
    %1337 = vmatpush1.xpose.msra.mxu0 0.0
    %1338 = vmatprep.subr.mxu0 0.0
    %1339 = vmatpush1.xpose.msra.mxu0 %v1306
    %1340 = vmatprep.subr.mxu0 0.0
    %1341 = vmatpush2.xpose.msra.mxu0 0.0
    %1342 = vmatprep.subr.mxu0 0.0
    %1343 = vmatpush2.xpose.msra.mxu0 0.0
    %1344 = vmatprep.subr.mxu0 0.0
    %1345 = vmatpush2.xpose.msra.mxu0 0.0
    %1346 = vmatprep.subr.mxu0 0.0
    %1347 = vmatpush2.xpose.msra.mxu0 0.0
    %1348 = vmatprep.subr.mxu0 0.0
    %1349 = vmatpush2.xpose.msra.mxu0 0.0
    %1350 = vmatprep.subr.mxu0 0.0
    %1351 = vmatpush2.xpose.msra.mxu0 0.0
    %1352 = vmatprep.subr.mxu0 0.0
    %1353 = vmatpush2.xpose.msra.mxu0 0.0
    %1354 = vmatprep.subr.mxu0 0.0
    %1355 = vmatpush2.xpose.msra.mxu0 0.0
    %1356 = vmatprep.subr.mxu0 0.0
    %1357 = vmatpush2.xpose.msra.mxu0 0.0
    %1358 = vmatprep.subr.mxu0 0.0
    %1359 = vmatpush2.xpose.msra.mxu0 0.0
    %1360 = vmatprep.subr.mxu0 0.0
    %1361 = vmatpush2.xpose.msra.mxu0 0.0
    %1362 = vmatprep.subr.mxu0 0.0
    %1363 = vmatpush2.xpose.msra.mxu0 0.0
    %1364 = vmatprep.subr.mxu0 0.0
    %1365 = vmatpush2.xpose.msra.mxu0 0.0
    %1366 = vmatprep.subr.mxu0 0.0
    %1367 = vmatpush2.xpose.msra.mxu0 0.0
    %1368 = vmatprep.subr.mxu0 0.0
    %1369 = vmatpush2.xpose.msra.mxu0 0.0
    %1370 = vmatprep.subr.mxu0 0.0
    %1371 = vmatpush2.xpose.msra.mxu0 0.0
    %1372 = vmatprep.mubr.f32.mxu0 0.0
    %1373 = vmatmul.mubr.f32.gmra.mxu0 %v1303
    %v1374 = vpop.f32.mrf.mxu0
    %v1375 = vadd.f32 0.0, %v1374
    %v1376 = vpop.f32.mrf.mxu0
    %1377 = vdwg.mxu0
    %v1379 = vsel %vm1073, %v477, 0
    %v1382 = vsel %vm1073, %v773, 0
    %1384 = vmatprep.subr.mxu0 0.0
    %1385 = vmatpush1.xpose.msra.mxu0 0.0
    %1386 = vmatprep.subr.mxu0 0.0
    %1387 = vmatpush1.xpose.msra.mxu0 0.0
    %1388 = vmatprep.subr.mxu0 0.0
    %1389 = vmatpush1.xpose.msra.mxu0 0.0
    %1390 = vmatprep.subr.mxu0 0.0
    %1391 = vmatpush1.xpose.msra.mxu0 0.0
    %1392 = vmatprep.subr.mxu0 0.0
    %1393 = vmatpush1.xpose.msra.mxu0 0.0
    %1394 = vmatprep.subr.mxu0 0.0
    %1395 = vmatpush1.xpose.msra.mxu0 0.0
    %1396 = vmatprep.subr.mxu0 0.0
    %1397 = vmatpush1.xpose.msra.mxu0 0.0
    %1398 = vmatprep.subr.mxu0 0.0
    %1399 = vmatpush1.xpose.msra.mxu0 0.0
    %1400 = vmatprep.subr.mxu0 0.0
    %1401 = vmatpush1.xpose.msra.mxu0 0.0
    %1402 = vmatprep.subr.mxu0 0.0
    %1403 = vmatpush1.xpose.msra.mxu0 0.0
    %1404 = vmatprep.subr.mxu0 0.0
    %1405 = vmatpush1.xpose.msra.mxu0 0.0
    %1406 = vmatprep.subr.mxu0 0.0
    %1407 = vmatpush1.xpose.msra.mxu0 0.0
    %1408 = vmatprep.subr.mxu0 0.0
    %1409 = vmatpush1.xpose.msra.mxu0 0.0
    %1410 = vmatprep.subr.mxu0 0.0
    %1411 = vmatpush1.xpose.msra.mxu0 0.0
    %1412 = vmatprep.subr.mxu0 0.0
    %1413 = vmatpush1.xpose.msra.mxu0 0.0
    %1414 = vmatprep.subr.mxu0 0.0
    %1415 = vmatpush1.xpose.msra.mxu0 %v1382
    %1416 = vmatprep.subr.mxu0 0.0
    %1417 = vmatpush2.xpose.msra.mxu0 0.0
    %1418 = vmatprep.subr.mxu0 0.0
    %1419 = vmatpush2.xpose.msra.mxu0 0.0
    %1420 = vmatprep.subr.mxu0 0.0
    %1421 = vmatpush2.xpose.msra.mxu0 0.0
    %1422 = vmatprep.subr.mxu0 0.0
    %1423 = vmatpush2.xpose.msra.mxu0 0.0
    %1424 = vmatprep.subr.mxu0 0.0
    %1425 = vmatpush2.xpose.msra.mxu0 0.0
    %1426 = vmatprep.subr.mxu0 0.0
    %1427 = vmatpush2.xpose.msra.mxu0 0.0
    %1428 = vmatprep.subr.mxu0 0.0
    %1429 = vmatpush2.xpose.msra.mxu0 0.0
    %1430 = vmatprep.subr.mxu0 0.0
    %1431 = vmatpush2.xpose.msra.mxu0 0.0
    %1432 = vmatprep.subr.mxu0 0.0
    %1433 = vmatpush2.xpose.msra.mxu0 0.0
    %1434 = vmatprep.subr.mxu0 0.0
    %1435 = vmatpush2.xpose.msra.mxu0 0.0
    %1436 = vmatprep.subr.mxu0 0.0
    %1437 = vmatpush2.xpose.msra.mxu0 0.0
    %1438 = vmatprep.subr.mxu0 0.0
    %1439 = vmatpush2.xpose.msra.mxu0 0.0
    %1440 = vmatprep.subr.mxu0 0.0
    %1441 = vmatpush2.xpose.msra.mxu0 0.0
    %1442 = vmatprep.subr.mxu0 0.0
    %1443 = vmatpush2.xpose.msra.mxu0 0.0
    %1444 = vmatprep.subr.mxu0 0.0
    %1445 = vmatpush2.xpose.msra.mxu0 0.0
    %1446 = vmatprep.subr.mxu0 0.0
    %1447 = vmatpush2.xpose.msra.mxu0 0.0
    %1448 = vmatprep.mubr.f32.mxu0 0.0
    %1449 = vmatmul.mubr.f32.gmra.mxu0 %v1379
    %v1450 = vpop.f32.mrf.mxu0
    %v1451 = vadd.f32 0.0, %v1450
    %v1452 = vpop.f32.mrf.mxu0
    %1453 = vdwg.mxu0
    %v1455 = vsel %vm1073, %v478, 0
    %v1458 = vsel %vm1073, %v774, 0
    %1460 = vmatprep.subr.mxu0 0.0
    %1461 = vmatpush1.xpose.msra.mxu0 0.0
    %1462 = vmatprep.subr.mxu0 0.0
    %1463 = vmatpush1.xpose.msra.mxu0 0.0
    %1464 = vmatprep.subr.mxu0 0.0
    %1465 = vmatpush1.xpose.msra.mxu0 0.0
    %1466 = vmatprep.subr.mxu0 0.0
    %1467 = vmatpush1.xpose.msra.mxu0 0.0
    %1468 = vmatprep.subr.mxu0 0.0
    %1469 = vmatpush1.xpose.msra.mxu0 0.0
    %1470 = vmatprep.subr.mxu0 0.0
    %1471 = vmatpush1.xpose.msra.mxu0 0.0
    %1472 = vmatprep.subr.mxu0 0.0
    %1473 = vmatpush1.xpose.msra.mxu0 0.0
    %1474 = vmatprep.subr.mxu0 0.0
    %1475 = vmatpush1.xpose.msra.mxu0 0.0
    %1476 = vmatprep.subr.mxu0 0.0
    %1477 = vmatpush1.xpose.msra.mxu0 0.0
    %1478 = vmatprep.subr.mxu0 0.0
    %1479 = vmatpush1.xpose.msra.mxu0 0.0
    %1480 = vmatprep.subr.mxu0 0.0
    %1481 = vmatpush1.xpose.msra.mxu0 0.0
    %1482 = vmatprep.subr.mxu0 0.0
    %1483 = vmatpush1.xpose.msra.mxu0 0.0
    %1484 = vmatprep.subr.mxu0 0.0
    %1485 = vmatpush1.xpose.msra.mxu0 0.0
    %1486 = vmatprep.subr.mxu0 0.0
    %1487 = vmatpush1.xpose.msra.mxu0 0.0
    %1488 = vmatprep.subr.mxu0 0.0
    %1489 = vmatpush1.xpose.msra.mxu0 0.0
    %1490 = vmatprep.subr.mxu0 0.0
    %1491 = vmatpush1.xpose.msra.mxu0 %v1458
    %1492 = vmatprep.subr.mxu0 0.0
    %1493 = vmatpush2.xpose.msra.mxu0 0.0
    %1494 = vmatprep.subr.mxu0 0.0
    %1495 = vmatpush2.xpose.msra.mxu0 0.0
    %1496 = vmatprep.subr.mxu0 0.0
    %1497 = vmatpush2.xpose.msra.mxu0 0.0
    %1498 = vmatprep.subr.mxu0 0.0
    %1499 = vmatpush2.xpose.msra.mxu0 0.0
    %1500 = vmatprep.subr.mxu0 0.0
    %1501 = vmatpush2.xpose.msra.mxu0 0.0
    %1502 = vmatprep.subr.mxu0 0.0
    %1503 = vmatpush2.xpose.msra.mxu0 0.0
    %1504 = vmatprep.subr.mxu0 0.0
    %1505 = vmatpush2.xpose.msra.mxu0 0.0
    %1506 = vmatprep.subr.mxu0 0.0
    %1507 = vmatpush2.xpose.msra.mxu0 0.0
    %1508 = vmatprep.subr.mxu0 0.0
    %1509 = vmatpush2.xpose.msra.mxu0 0.0
    %1510 = vmatprep.subr.mxu0 0.0
    %1511 = vmatpush2.xpose.msra.mxu0 0.0
    %1512 = vmatprep.subr.mxu0 0.0
    %1513 = vmatpush2.xpose.msra.mxu0 0.0
    %1514 = vmatprep.subr.mxu0 0.0
    %1515 = vmatpush2.xpose.msra.mxu0 0.0
    %1516 = vmatprep.subr.mxu0 0.0
    %1517 = vmatpush2.xpose.msra.mxu0 0.0
    %1518 = vmatprep.subr.mxu0 0.0
    %1519 = vmatpush2.xpose.msra.mxu0 0.0
    %1520 = vmatprep.subr.mxu0 0.0
    %1521 = vmatpush2.xpose.msra.mxu0 0.0
    %1522 = vmatprep.subr.mxu0 0.0
    %1523 = vmatpush2.xpose.msra.mxu0 0.0
    %1524 = vmatprep.mubr.f32.mxu0 0.0
    %1525 = vmatmul.mubr.f32.gmra.mxu0 %v1455
    %v1526 = vpop.f32.mrf.mxu0
    %v1527 = vadd.f32 0.0, %v1526
    %v1528 = vpop.f32.mrf.mxu0
    %1529 = vdwg.mxu0
    %v1531 = vsel %vm1073, %v479, 0
    %v1534 = vsel %vm1073, %v775, 0
    %1536 = vmatprep.subr.mxu0 0.0
    %1537 = vmatpush1.xpose.msra.mxu0 0.0
    %1538 = vmatprep.subr.mxu0 0.0
    %1539 = vmatpush1.xpose.msra.mxu0 0.0
    %1540 = vmatprep.subr.mxu0 0.0
    %1541 = vmatpush1.xpose.msra.mxu0 0.0
    %1542 = vmatprep.subr.mxu0 0.0
    %1543 = vmatpush1.xpose.msra.mxu0 0.0
    %1544 = vmatprep.subr.mxu0 0.0
    %1545 = vmatpush1.xpose.msra.mxu0 0.0
    %1546 = vmatprep.subr.mxu0 0.0
    %1547 = vmatpush1.xpose.msra.mxu0 0.0
    %1548 = vmatprep.subr.mxu0 0.0
    %1549 = vmatpush1.xpose.msra.mxu0 0.0
    %1550 = vmatprep.subr.mxu0 0.0
    %1551 = vmatpush1.xpose.msra.mxu0 0.0
    %1552 = vmatprep.subr.mxu0 0.0
    %1553 = vmatpush1.xpose.msra.mxu0 0.0
    %1554 = vmatprep.subr.mxu0 0.0
    %1555 = vmatpush1.xpose.msra.mxu0 0.0
    %1556 = vmatprep.subr.mxu0 0.0
    %1557 = vmatpush1.xpose.msra.mxu0 0.0
    %1558 = vmatprep.subr.mxu0 0.0
    %1559 = vmatpush1.xpose.msra.mxu0 0.0
    %1560 = vmatprep.subr.mxu0 0.0
    %1561 = vmatpush1.xpose.msra.mxu0 0.0
    %1562 = vmatprep.subr.mxu0 0.0
    %1563 = vmatpush1.xpose.msra.mxu0 0.0
    %1564 = vmatprep.subr.mxu0 0.0
    %1565 = vmatpush1.xpose.msra.mxu0 0.0
    %1566 = vmatprep.subr.mxu0 0.0
    %1567 = vmatpush1.xpose.msra.mxu0 %v1534
    %1568 = vmatprep.subr.mxu0 0.0
    %1569 = vmatpush2.xpose.msra.mxu0 0.0
    %1570 = vmatprep.subr.mxu0 0.0
    %1571 = vmatpush2.xpose.msra.mxu0 0.0
    %1572 = vmatprep.subr.mxu0 0.0
    %1573 = vmatpush2.xpose.msra.mxu0 0.0
    %1574 = vmatprep.subr.mxu0 0.0
    %1575 = vmatpush2.xpose.msra.mxu0 0.0
    %1576 = vmatprep.subr.mxu0 0.0
    %1577 = vmatpush2.xpose.msra.mxu0 0.0
    %1578 = vmatprep.subr.mxu0 0.0
    %1579 = vmatpush2.xpose.msra.mxu0 0.0
    %1580 = vmatprep.subr.mxu0 0.0
    %1581 = vmatpush2.xpose.msra.mxu0 0.0
    %1582 = vmatprep.subr.mxu0 0.0
    %1583 = vmatpush2.xpose.msra.mxu0 0.0
    %1584 = vmatprep.subr.mxu0 0.0
    %1585 = vmatpush2.xpose.msra.mxu0 0.0
    %1586 = vmatprep.subr.mxu0 0.0
    %1587 = vmatpush2.xpose.msra.mxu0 0.0
    %1588 = vmatprep.subr.mxu0 0.0
    %1589 = vmatpush2.xpose.msra.mxu0 0.0
    %1590 = vmatprep.subr.mxu0 0.0
    %1591 = vmatpush2.xpose.msra.mxu0 0.0
    %1592 = vmatprep.subr.mxu0 0.0
    %1593 = vmatpush2.xpose.msra.mxu0 0.0
    %1594 = vmatprep.subr.mxu0 0.0
    %1595 = vmatpush2.xpose.msra.mxu0 0.0
    %1596 = vmatprep.subr.mxu0 0.0
    %1597 = vmatpush2.xpose.msra.mxu0 0.0
    %1598 = vmatprep.subr.mxu0 0.0
    %1599 = vmatpush2.xpose.msra.mxu0 0.0
    %1600 = vmatprep.mubr.f32.mxu0 0.0
    %1601 = vmatmul.mubr.f32.gmra.mxu0 %v1531
    %v1602 = vpop.f32.mrf.mxu0
    %v1603 = vadd.f32 0.0, %v1602
    %v1604 = vpop.f32.mrf.mxu0
    %1605 = vdwg.mxu0
    %v1607 = vsel %vm1073, %v480, 0
    %v1610 = vsel %vm1073, %v776, 0
    %1612 = vmatprep.subr.mxu0 0.0
    %1613 = vmatpush1.xpose.msra.mxu0 0.0
    %1614 = vmatprep.subr.mxu0 0.0
    %1615 = vmatpush1.xpose.msra.mxu0 0.0
    %1616 = vmatprep.subr.mxu0 0.0
    %1617 = vmatpush1.xpose.msra.mxu0 0.0
    %1618 = vmatprep.subr.mxu0 0.0
    %1619 = vmatpush1.xpose.msra.mxu0 0.0
    %1620 = vmatprep.subr.mxu0 0.0
    %1621 = vmatpush1.xpose.msra.mxu0 0.0
    %1622 = vmatprep.subr.mxu0 0.0
    %1623 = vmatpush1.xpose.msra.mxu0 0.0
    %1624 = vmatprep.subr.mxu0 0.0
    %1625 = vmatpush1.xpose.msra.mxu0 0.0
    %1626 = vmatprep.subr.mxu0 0.0
    %1627 = vmatpush1.xpose.msra.mxu0 0.0
    %1628 = vmatprep.subr.mxu0 0.0
    %1629 = vmatpush1.xpose.msra.mxu0 0.0
    %1630 = vmatprep.subr.mxu0 0.0
    %1631 = vmatpush1.xpose.msra.mxu0 0.0
    %1632 = vmatprep.subr.mxu0 0.0
    %1633 = vmatpush1.xpose.msra.mxu0 0.0
    %1634 = vmatprep.subr.mxu0 0.0
    %1635 = vmatpush1.xpose.msra.mxu0 0.0
    %1636 = vmatprep.subr.mxu0 0.0
    %1637 = vmatpush1.xpose.msra.mxu0 0.0
    %1638 = vmatprep.subr.mxu0 0.0
    %1639 = vmatpush1.xpose.msra.mxu0 0.0
    %1640 = vmatprep.subr.mxu0 0.0
    %1641 = vmatpush1.xpose.msra.mxu0 0.0
    %1642 = vmatprep.subr.mxu0 0.0
    %1643 = vmatpush1.xpose.msra.mxu0 %v1610
    %1644 = vmatprep.subr.mxu0 0.0
    %1645 = vmatpush2.xpose.msra.mxu0 0.0
    %1646 = vmatprep.subr.mxu0 0.0
    %1647 = vmatpush2.xpose.msra.mxu0 0.0
    %1648 = vmatprep.subr.mxu0 0.0
    %1649 = vmatpush2.xpose.msra.mxu0 0.0
    %1650 = vmatprep.subr.mxu0 0.0
    %1651 = vmatpush2.xpose.msra.mxu0 0.0
    %1652 = vmatprep.subr.mxu0 0.0
    %1653 = vmatpush2.xpose.msra.mxu0 0.0
    %1654 = vmatprep.subr.mxu0 0.0
    %1655 = vmatpush2.xpose.msra.mxu0 0.0
    %1656 = vmatprep.subr.mxu0 0.0
    %1657 = vmatpush2.xpose.msra.mxu0 0.0
    %1658 = vmatprep.subr.mxu0 0.0
    %1659 = vmatpush2.xpose.msra.mxu0 0.0
    %1660 = vmatprep.subr.mxu0 0.0
    %1661 = vmatpush2.xpose.msra.mxu0 0.0
    %1662 = vmatprep.subr.mxu0 0.0
    %1663 = vmatpush2.xpose.msra.mxu0 0.0
    %1664 = vmatprep.subr.mxu0 0.0
    %1665 = vmatpush2.xpose.msra.mxu0 0.0
    %1666 = vmatprep.subr.mxu0 0.0
    %1667 = vmatpush2.xpose.msra.mxu0 0.0
    %1668 = vmatprep.subr.mxu0 0.0
    %1669 = vmatpush2.xpose.msra.mxu0 0.0
    %1670 = vmatprep.subr.mxu0 0.0
    %1671 = vmatpush2.xpose.msra.mxu0 0.0
    %1672 = vmatprep.subr.mxu0 0.0
    %1673 = vmatpush2.xpose.msra.mxu0 0.0
    %1674 = vmatprep.subr.mxu0 0.0
    %1675 = vmatpush2.xpose.msra.mxu0 0.0
    %1676 = vmatprep.mubr.f32.mxu0 0.0
    %1677 = vmatmul.mubr.f32.gmra.mxu0 %v1607
    %v1678 = vpop.f32.mrf.mxu0
    %v1679 = vadd.f32 0.0, %v1678
    %v1680 = vpop.f32.mrf.mxu0
    %1681 = vdwg.mxu0
    %v1682 = vlaneseq
    %v1683 = vshrl.u32 %v1682, 7
    %v1684 = vlaneseq
    %v1685 = vand.u32 %v1684, 127
    %vm1686 = vcmp.ge.s32.totalorder %v1683, %v1685
    %v1687 = vsel %vm1686, 1, 0
    %vm1688 = vcmp.eq.s32.totalorder %v1687, 1
    %v1689 = vsel %vm1688, %v1147, -1e+30
    %v1690 = vsel %vm1688, %v1223, -1e+30
    %v1691 = vsel %vm1688, %v1299, -1e+30
    %v1692 = vsel %vm1688, %v1375, -1e+30
    %v1693 = vsel %vm1688, %v1451, -1e+30
    %v1694 = vsel %vm1688, %v1527, -1e+30
    %v1695 = vsel %vm1688, %v1603, -1e+30
    %v1696 = vsel %vm1688, %v1679, -1e+30
    %v1697 = vsel %vm1073, %v1689, -inf
    %1698 = vmax.xlane.f32.xlu0 %v1697
    %v1699 = vpop.xlane.xlu0 %1698
    %v1700 = vsel %vm1073, %v1690, -inf
    %1701 = vmax.xlane.f32.xlu0 %v1700
    %v1702 = vpop.xlane.xlu0 %1701
    %v1703 = vsel %vm1073, %v1691, -inf
    %1704 = vmax.xlane.f32.xlu0 %v1703
    %v1705 = vpop.xlane.xlu0 %1704
    %v1706 = vsel %vm1073, %v1692, -inf
    %1707 = vmax.xlane.f32.xlu0 %v1706
    %v1708 = vpop.xlane.xlu0 %1707
    %v1709 = vsel %vm1073, %v1693, -inf
    %1710 = vmax.xlane.f32.xlu0 %v1709
    %v1711 = vpop.xlane.xlu0 %1710
    %v1712 = vsel %vm1073, %v1694, -inf
    %1713 = vmax.xlane.f32.xlu0 %v1712
    %v1714 = vpop.xlane.xlu0 %1713
    %v1715 = vsel %vm1073, %v1695, -inf
    %1716 = vmax.xlane.f32.xlu0 %v1715
    %v1717 = vpop.xlane.xlu0 %1716
    %v1718 = vsel %vm1073, %v1696, -inf
    %1719 = vmax.xlane.f32.xlu0 %v1718
    %v1720 = vpop.xlane.xlu0 %1719
    %v1721 = vsub.f32 %v1689, %v1699
    %v1722 = vsub.f32 %v1690, %v1702
    %v1723 = vsub.f32 %v1691, %v1705
    %v1724 = vsub.f32 %v1692, %v1708
    %v1725 = vsub.f32 %v1693, %v1711
    %v1726 = vsub.f32 %v1694, %v1714
    %v1727 = vsub.f32 %v1695, %v1717
    %v1728 = vsub.f32 %v1696, %v1720
    %v1729 = vmul.f32 %v1721, 1.442695
    %v1730 = vpow.pop %v1729
    %v1731 = vmul.f32 %v1722, 1.442695
    %v1732 = vpow.pop %v1731
    %v1733 = vmul.f32 %v1723, 1.442695
    %v1734 = vpow.pop %v1733
    %v1735 = vmul.f32 %v1724, 1.442695
    %v1736 = vpow.pop %v1735
    %v1737 = vmul.f32 %v1725, 1.442695
    %v1738 = vpow.pop %v1737
    %v1739 = vmul.f32 %v1726, 1.442695
    %v1740 = vpow.pop %v1739
    %v1741 = vmul.f32 %v1727, 1.442695
    %v1742 = vpow.pop %v1741
    %v1743 = vmul.f32 %v1728, 1.442695
    %v1744 = vpow.pop %v1743
    %v1745 = vsel %vm1073, %v1730, 0.0
    %1746 = vadd.xlane.f32.xlu0 %v1745
    %v1747 = vpop.xlane.xlu0 %1746
    %v1748 = vsel %vm1073, %v1732, 0.0
    %1749 = vadd.xlane.f32.xlu0 %v1748
    %v1750 = vpop.xlane.xlu0 %1749
    %v1751 = vsel %vm1073, %v1734, 0.0
    %1752 = vadd.xlane.f32.xlu0 %v1751
    %v1753 = vpop.xlane.xlu0 %1752
    %v1754 = vsel %vm1073, %v1736, 0.0
    %1755 = vadd.xlane.f32.xlu0 %v1754
    %v1756 = vpop.xlane.xlu0 %1755
    %v1757 = vsel %vm1073, %v1738, 0.0
    %1758 = vadd.xlane.f32.xlu0 %v1757
    %v1759 = vpop.xlane.xlu0 %1758
    %v1760 = vsel %vm1073, %v1740, 0.0
    %1761 = vadd.xlane.f32.xlu0 %v1760
    %v1762 = vpop.xlane.xlu0 %1761
    %v1763 = vsel %vm1073, %v1742, 0.0
    %1764 = vadd.xlane.f32.xlu0 %v1763
    %v1765 = vpop.xlane.xlu0 %1764
    %v1766 = vsel %vm1073, %v1744, 0.0
    %1767 = vadd.xlane.f32.xlu0 %v1766
    %v1768 = vpop.xlane.xlu0 %1767
    %v1769 = vrcp.pop %v1747
    %v1770 = vmul.f32 %v1730, %v1769
    %v1771 = vrcp.pop %v1750
    %v1772 = vmul.f32 %v1732, %v1771
    %v1773 = vrcp.pop %v1753
    %v1774 = vmul.f32 %v1734, %v1773
    %v1775 = vrcp.pop %v1756
    %v1776 = vmul.f32 %v1736, %v1775
    %v1777 = vrcp.pop %v1759
    %v1778 = vmul.f32 %v1738, %v1777
    %v1779 = vrcp.pop %v1762
    %v1780 = vmul.f32 %v1740, %v1779
    %v1781 = vrcp.pop %v1765
    %v1782 = vmul.f32 %v1742, %v1781
    %v1783 = vrcp.pop %v1768
    %v1784 = vmul.f32 %v1744, %v1783
    %v1786 = vsel %vm1073, %v1770, 0
    %1788 = vmatprep.subr.mxu0 0.0
    %1789 = vmatpush1.msra.mxu0 0.0
    %1790 = vmatprep.subr.mxu0 0.0
    %1791 = vmatpush1.msra.mxu0 0.0
    %1792 = vmatprep.subr.mxu0 0.0
    %1793 = vmatpush1.msra.mxu0 0.0
    %1794 = vmatprep.subr.mxu0 0.0
    %1795 = vmatpush1.msra.mxu0 0.0
    %1796 = vmatprep.subr.mxu0 0.0
    %1797 = vmatpush1.msra.mxu0 0.0
    %1798 = vmatprep.subr.mxu0 0.0
    %1799 = vmatpush1.msra.mxu0 0.0
    %1800 = vmatprep.subr.mxu0 0.0
    %1801 = vmatpush1.msra.mxu0 0.0
    %1802 = vmatprep.subr.mxu0 0.0
    %1803 = vmatpush1.msra.mxu0 0.0
    %1804 = vmatprep.subr.mxu0 0.0
    %1805 = vmatpush1.msra.mxu0 0.0
    %1806 = vmatprep.subr.mxu0 0.0
    %1807 = vmatpush1.msra.mxu0 0.0
    %1808 = vmatprep.subr.mxu0 0.0
    %1809 = vmatpush1.msra.mxu0 0.0
    %1810 = vmatprep.subr.mxu0 0.0
    %1811 = vmatpush1.msra.mxu0 0.0
    %1812 = vmatprep.subr.mxu0 0.0
    %1813 = vmatpush1.msra.mxu0 0.0
    %1814 = vmatprep.subr.mxu0 0.0
    %1815 = vmatpush1.msra.mxu0 0.0
    %1816 = vmatprep.subr.mxu0 0.0
    %1817 = vmatpush1.msra.mxu0 0.0
    %1818 = vmatprep.subr.mxu0 0.0
    %1819 = vmatpush1.msra.mxu0 %v1001
    %1820 = vmatprep.subr.mxu0 0.0
    %1821 = vmatpush2.msra.mxu0 0.0
    %1822 = vmatprep.subr.mxu0 0.0
    %1823 = vmatpush2.msra.mxu0 0.0
    %1824 = vmatprep.subr.mxu0 0.0
    %1825 = vmatpush2.msra.mxu0 0.0
    %1826 = vmatprep.subr.mxu0 0.0
    %1827 = vmatpush2.msra.mxu0 0.0
    %1828 = vmatprep.subr.mxu0 0.0
    %1829 = vmatpush2.msra.mxu0 0.0
    %1830 = vmatprep.subr.mxu0 0.0
    %1831 = vmatpush2.msra.mxu0 0.0
    %1832 = vmatprep.subr.mxu0 0.0
    %1833 = vmatpush2.msra.mxu0 0.0
    %1834 = vmatprep.subr.mxu0 0.0
    %1835 = vmatpush2.msra.mxu0 0.0
    %1836 = vmatprep.subr.mxu0 0.0
    %1837 = vmatpush2.msra.mxu0 0.0
    %1838 = vmatprep.subr.mxu0 0.0
    %1839 = vmatpush2.msra.mxu0 0.0
    %1840 = vmatprep.subr.mxu0 0.0
    %1841 = vmatpush2.msra.mxu0 0.0
    %1842 = vmatprep.subr.mxu0 0.0
    %1843 = vmatpush2.msra.mxu0 0.0
    %1844 = vmatprep.subr.mxu0 0.0
    %1845 = vmatpush2.msra.mxu0 0.0
    %1846 = vmatprep.subr.mxu0 0.0
    %1847 = vmatpush2.msra.mxu0 0.0
    %1848 = vmatprep.subr.mxu0 0.0
    %1849 = vmatpush2.msra.mxu0 0.0
    %1850 = vmatprep.subr.mxu0 0.0
    %1851 = vmatpush2.msra.mxu0 0.0
    %1852 = vmatprep.mubr.f32.mxu0 0.0
    %1853 = vmatmul.mubr.f32.gmra.mxu0 %v1786
    %v1854 = vpop.f32.mrf.mxu0
    %v1855 = vadd.f32 0.0, %v1854
    %v1856 = vpop.f32.mrf.mxu0
    %1857 = vdwg.mxu0
    %v1859 = vsel %vm1073, %v1772, 0
    %1861 = vmatprep.subr.mxu0 0.0
    %1862 = vmatpush1.msra.mxu0 0.0
    %1863 = vmatprep.subr.mxu0 0.0
    %1864 = vmatpush1.msra.mxu0 0.0
    %1865 = vmatprep.subr.mxu0 0.0
    %1866 = vmatpush1.msra.mxu0 0.0
    %1867 = vmatprep.subr.mxu0 0.0
    %1868 = vmatpush1.msra.mxu0 0.0
    %1869 = vmatprep.subr.mxu0 0.0
    %1870 = vmatpush1.msra.mxu0 0.0
    %1871 = vmatprep.subr.mxu0 0.0
    %1872 = vmatpush1.msra.mxu0 0.0
    %1873 = vmatprep.subr.mxu0 0.0
    %1874 = vmatpush1.msra.mxu0 0.0
    %1875 = vmatprep.subr.mxu0 0.0
    %1876 = vmatpush1.msra.mxu0 0.0
    %1877 = vmatprep.subr.mxu0 0.0
    %1878 = vmatpush1.msra.mxu0 0.0
    %1879 = vmatprep.subr.mxu0 0.0
    %1880 = vmatpush1.msra.mxu0 0.0
    %1881 = vmatprep.subr.mxu0 0.0
    %1882 = vmatpush1.msra.mxu0 0.0
    %1883 = vmatprep.subr.mxu0 0.0
    %1884 = vmatpush1.msra.mxu0 0.0
    %1885 = vmatprep.subr.mxu0 0.0
    %1886 = vmatpush1.msra.mxu0 0.0
    %1887 = vmatprep.subr.mxu0 0.0
    %1888 = vmatpush1.msra.mxu0 0.0
    %1889 = vmatprep.subr.mxu0 0.0
    %1890 = vmatpush1.msra.mxu0 0.0
    %1891 = vmatprep.subr.mxu0 0.0
    %1892 = vmatpush1.msra.mxu0 %v1002
    %1893 = vmatprep.subr.mxu0 0.0
    %1894 = vmatpush2.msra.mxu0 0.0
    %1895 = vmatprep.subr.mxu0 0.0
    %1896 = vmatpush2.msra.mxu0 0.0
    %1897 = vmatprep.subr.mxu0 0.0
    %1898 = vmatpush2.msra.mxu0 0.0
    %1899 = vmatprep.subr.mxu0 0.0
    %1900 = vmatpush2.msra.mxu0 0.0
    %1901 = vmatprep.subr.mxu0 0.0
    %1902 = vmatpush2.msra.mxu0 0.0
    %1903 = vmatprep.subr.mxu0 0.0
    %1904 = vmatpush2.msra.mxu0 0.0
    %1905 = vmatprep.subr.mxu0 0.0
    %1906 = vmatpush2.msra.mxu0 0.0
    %1907 = vmatprep.subr.mxu0 0.0
    %1908 = vmatpush2.msra.mxu0 0.0
    %1909 = vmatprep.subr.mxu0 0.0
    %1910 = vmatpush2.msra.mxu0 0.0
    %1911 = vmatprep.subr.mxu0 0.0
    %1912 = vmatpush2.msra.mxu0 0.0
    %1913 = vmatprep.subr.mxu0 0.0
    %1914 = vmatpush2.msra.mxu0 0.0
    %1915 = vmatprep.subr.mxu0 0.0
    %1916 = vmatpush2.msra.mxu0 0.0
    %1917 = vmatprep.subr.mxu0 0.0
    %1918 = vmatpush2.msra.mxu0 0.0
    %1919 = vmatprep.subr.mxu0 0.0
    %1920 = vmatpush2.msra.mxu0 0.0
    %1921 = vmatprep.subr.mxu0 0.0
    %1922 = vmatpush2.msra.mxu0 0.0
    %1923 = vmatprep.subr.mxu0 0.0
    %1924 = vmatpush2.msra.mxu0 0.0
    %1925 = vmatprep.mubr.f32.mxu0 0.0
    %1926 = vmatmul.mubr.f32.gmra.mxu0 %v1859
    %v1927 = vpop.f32.mrf.mxu0
    %v1928 = vadd.f32 0.0, %v1927
    %v1929 = vpop.f32.mrf.mxu0
    %1930 = vdwg.mxu0
    %v1932 = vsel %vm1073, %v1774, 0
    %1934 = vmatprep.subr.mxu0 0.0
    %1935 = vmatpush1.msra.mxu0 0.0
    %1936 = vmatprep.subr.mxu0 0.0
    %1937 = vmatpush1.msra.mxu0 0.0
    %1938 = vmatprep.subr.mxu0 0.0
    %1939 = vmatpush1.msra.mxu0 0.0
    %1940 = vmatprep.subr.mxu0 0.0
    %1941 = vmatpush1.msra.mxu0 0.0
    %1942 = vmatprep.subr.mxu0 0.0
    %1943 = vmatpush1.msra.mxu0 0.0
    %1944 = vmatprep.subr.mxu0 0.0
    %1945 = vmatpush1.msra.mxu0 0.0
    %1946 = vmatprep.subr.mxu0 0.0
    %1947 = vmatpush1.msra.mxu0 0.0
    %1948 = vmatprep.subr.mxu0 0.0
    %1949 = vmatpush1.msra.mxu0 0.0
    %1950 = vmatprep.subr.mxu0 0.0
    %1951 = vmatpush1.msra.mxu0 0.0
    %1952 = vmatprep.subr.mxu0 0.0
    %1953 = vmatpush1.msra.mxu0 0.0
    %1954 = vmatprep.subr.mxu0 0.0
    %1955 = vmatpush1.msra.mxu0 0.0
    %1956 = vmatprep.subr.mxu0 0.0
    %1957 = vmatpush1.msra.mxu0 0.0
    %1958 = vmatprep.subr.mxu0 0.0
    %1959 = vmatpush1.msra.mxu0 0.0
    %1960 = vmatprep.subr.mxu0 0.0
    %1961 = vmatpush1.msra.mxu0 0.0
    %1962 = vmatprep.subr.mxu0 0.0
    %1963 = vmatpush1.msra.mxu0 0.0
    %1964 = vmatprep.subr.mxu0 0.0
    %1965 = vmatpush1.msra.mxu0 %v1003
    %1966 = vmatprep.subr.mxu0 0.0
    %1967 = vmatpush2.msra.mxu0 0.0
    %1968 = vmatprep.subr.mxu0 0.0
    %1969 = vmatpush2.msra.mxu0 0.0
    %1970 = vmatprep.subr.mxu0 0.0
    %1971 = vmatpush2.msra.mxu0 0.0
    %1972 = vmatprep.subr.mxu0 0.0
    %1973 = vmatpush2.msra.mxu0 0.0
    %1974 = vmatprep.subr.mxu0 0.0
    %1975 = vmatpush2.msra.mxu0 0.0
    %1976 = vmatprep.subr.mxu0 0.0
    %1977 = vmatpush2.msra.mxu0 0.0
    %1978 = vmatprep.subr.mxu0 0.0
    %1979 = vmatpush2.msra.mxu0 0.0
    %1980 = vmatprep.subr.mxu0 0.0
    %1981 = vmatpush2.msra.mxu0 0.0
    %1982 = vmatprep.subr.mxu0 0.0
    %1983 = vmatpush2.msra.mxu0 0.0
    %1984 = vmatprep.subr.mxu0 0.0
    %1985 = vmatpush2.msra.mxu0 0.0
    %1986 = vmatprep.subr.mxu0 0.0
    %1987 = vmatpush2.msra.mxu0 0.0
    %1988 = vmatprep.subr.mxu0 0.0
    %1989 = vmatpush2.msra.mxu0 0.0
    %1990 = vmatprep.subr.mxu0 0.0
    %1991 = vmatpush2.msra.mxu0 0.0
    %1992 = vmatprep.subr.mxu0 0.0
    %1993 = vmatpush2.msra.mxu0 0.0
    %1994 = vmatprep.subr.mxu0 0.0
    %1995 = vmatpush2.msra.mxu0 0.0
    %1996 = vmatprep.subr.mxu0 0.0
    %1997 = vmatpush2.msra.mxu0 0.0
    %1998 = vmatprep.mubr.f32.mxu0 0.0
    %1999 = vmatmul.mubr.f32.gmra.mxu0 %v1932
    %v2000 = vpop.f32.mrf.mxu0
    %v2001 = vadd.f32 0.0, %v2000
    %v2002 = vpop.f32.mrf.mxu0
    %2003 = vdwg.mxu0
    %v2005 = vsel %vm1073, %v1776, 0
    %2007 = vmatprep.subr.mxu0 0.0
    %2008 = vmatpush1.msra.mxu0 0.0
    %2009 = vmatprep.subr.mxu0 0.0
    %2010 = vmatpush1.msra.mxu0 0.0
    %2011 = vmatprep.subr.mxu0 0.0
    %2012 = vmatpush1.msra.mxu0 0.0
    %2013 = vmatprep.subr.mxu0 0.0
    %2014 = vmatpush1.msra.mxu0 0.0
    %2015 = vmatprep.subr.mxu0 0.0
    %2016 = vmatpush1.msra.mxu0 0.0
    %2017 = vmatprep.subr.mxu0 0.0
    %2018 = vmatpush1.msra.mxu0 0.0
    %2019 = vmatprep.subr.mxu0 0.0
    %2020 = vmatpush1.msra.mxu0 0.0
    %2021 = vmatprep.subr.mxu0 0.0
    %2022 = vmatpush1.msra.mxu0 0.0
    %2023 = vmatprep.subr.mxu0 0.0
    %2024 = vmatpush1.msra.mxu0 0.0
    %2025 = vmatprep.subr.mxu0 0.0
    %2026 = vmatpush1.msra.mxu0 0.0
    %2027 = vmatprep.subr.mxu0 0.0
    %2028 = vmatpush1.msra.mxu0 0.0
    %2029 = vmatprep.subr.mxu0 0.0
    %2030 = vmatpush1.msra.mxu0 0.0
    %2031 = vmatprep.subr.mxu0 0.0
    %2032 = vmatpush1.msra.mxu0 0.0
    %2033 = vmatprep.subr.mxu0 0.0
    %2034 = vmatpush1.msra.mxu0 0.0
    %2035 = vmatprep.subr.mxu0 0.0
    %2036 = vmatpush1.msra.mxu0 0.0
    %2037 = vmatprep.subr.mxu0 0.0
    %2038 = vmatpush1.msra.mxu0 %v1004
    %2039 = vmatprep.subr.mxu0 0.0
    %2040 = vmatpush2.msra.mxu0 0.0
    %2041 = vmatprep.subr.mxu0 0.0
    %2042 = vmatpush2.msra.mxu0 0.0
    %2043 = vmatprep.subr.mxu0 0.0
    %2044 = vmatpush2.msra.mxu0 0.0
    %2045 = vmatprep.subr.mxu0 0.0
    %2046 = vmatpush2.msra.mxu0 0.0
    %2047 = vmatprep.subr.mxu0 0.0
    %2048 = vmatpush2.msra.mxu0 0.0
    %2049 = vmatprep.subr.mxu0 0.0
    %2050 = vmatpush2.msra.mxu0 0.0
    %2051 = vmatprep.subr.mxu0 0.0
    %2052 = vmatpush2.msra.mxu0 0.0
    %2053 = vmatprep.subr.mxu0 0.0
    %2054 = vmatpush2.msra.mxu0 0.0
    %2055 = vmatprep.subr.mxu0 0.0
    %2056 = vmatpush2.msra.mxu0 0.0
    %2057 = vmatprep.subr.mxu0 0.0
    %2058 = vmatpush2.msra.mxu0 0.0
    %2059 = vmatprep.subr.mxu0 0.0
    %2060 = vmatpush2.msra.mxu0 0.0
    %2061 = vmatprep.subr.mxu0 0.0
    %2062 = vmatpush2.msra.mxu0 0.0
    %2063 = vmatprep.subr.mxu0 0.0
    %2064 = vmatpush2.msra.mxu0 0.0
    %2065 = vmatprep.subr.mxu0 0.0
    %2066 = vmatpush2.msra.mxu0 0.0
    %2067 = vmatprep.subr.mxu0 0.0
    %2068 = vmatpush2.msra.mxu0 0.0
    %2069 = vmatprep.subr.mxu0 0.0
    %2070 = vmatpush2.msra.mxu0 0.0
    %2071 = vmatprep.mubr.f32.mxu0 0.0
    %2072 = vmatmul.mubr.f32.gmra.mxu0 %v2005
    %v2073 = vpop.f32.mrf.mxu0
    %v2074 = vadd.f32 0.0, %v2073
    %v2075 = vpop.f32.mrf.mxu0
    %2076 = vdwg.mxu0
    %v2078 = vsel %vm1073, %v1778, 0
    %2080 = vmatprep.subr.mxu0 0.0
    %2081 = vmatpush1.msra.mxu0 0.0
    %2082 = vmatprep.subr.mxu0 0.0
    %2083 = vmatpush1.msra.mxu0 0.0
    %2084 = vmatprep.subr.mxu0 0.0
    %2085 = vmatpush1.msra.mxu0 0.0
    %2086 = vmatprep.subr.mxu0 0.0
    %2087 = vmatpush1.msra.mxu0 0.0
    %2088 = vmatprep.subr.mxu0 0.0
    %2089 = vmatpush1.msra.mxu0 0.0
    %2090 = vmatprep.subr.mxu0 0.0
    %2091 = vmatpush1.msra.mxu0 0.0
    %2092 = vmatprep.subr.mxu0 0.0
    %2093 = vmatpush1.msra.mxu0 0.0
    %2094 = vmatprep.subr.mxu0 0.0
    %2095 = vmatpush1.msra.mxu0 0.0
    %2096 = vmatprep.subr.mxu0 0.0
    %2097 = vmatpush1.msra.mxu0 0.0
    %2098 = vmatprep.subr.mxu0 0.0
    %2099 = vmatpush1.msra.mxu0 0.0
    %2100 = vmatprep.subr.mxu0 0.0
    %2101 = vmatpush1.msra.mxu0 0.0
    %2102 = vmatprep.subr.mxu0 0.0
    %2103 = vmatpush1.msra.mxu0 0.0
    %2104 = vmatprep.subr.mxu0 0.0
    %2105 = vmatpush1.msra.mxu0 0.0
    %2106 = vmatprep.subr.mxu0 0.0
    %2107 = vmatpush1.msra.mxu0 0.0
    %2108 = vmatprep.subr.mxu0 0.0
    %2109 = vmatpush1.msra.mxu0 0.0
    %2110 = vmatprep.subr.mxu0 0.0
    %2111 = vmatpush1.msra.mxu0 %v1069
    %2112 = vmatprep.subr.mxu0 0.0
    %2113 = vmatpush2.msra.mxu0 0.0
    %2114 = vmatprep.subr.mxu0 0.0
    %2115 = vmatpush2.msra.mxu0 0.0
    %2116 = vmatprep.subr.mxu0 0.0
    %2117 = vmatpush2.msra.mxu0 0.0
    %2118 = vmatprep.subr.mxu0 0.0
    %2119 = vmatpush2.msra.mxu0 0.0
    %2120 = vmatprep.subr.mxu0 0.0
    %2121 = vmatpush2.msra.mxu0 0.0
    %2122 = vmatprep.subr.mxu0 0.0
    %2123 = vmatpush2.msra.mxu0 0.0
    %2124 = vmatprep.subr.mxu0 0.0
    %2125 = vmatpush2.msra.mxu0 0.0
    %2126 = vmatprep.subr.mxu0 0.0
    %2127 = vmatpush2.msra.mxu0 0.0
    %2128 = vmatprep.subr.mxu0 0.0
    %2129 = vmatpush2.msra.mxu0 0.0
    %2130 = vmatprep.subr.mxu0 0.0
    %2131 = vmatpush2.msra.mxu0 0.0
    %2132 = vmatprep.subr.mxu0 0.0
    %2133 = vmatpush2.msra.mxu0 0.0
    %2134 = vmatprep.subr.mxu0 0.0
    %2135 = vmatpush2.msra.mxu0 0.0
    %2136 = vmatprep.subr.mxu0 0.0
    %2137 = vmatpush2.msra.mxu0 0.0
    %2138 = vmatprep.subr.mxu0 0.0
    %2139 = vmatpush2.msra.mxu0 0.0
    %2140 = vmatprep.subr.mxu0 0.0
    %2141 = vmatpush2.msra.mxu0 0.0
    %2142 = vmatprep.subr.mxu0 0.0
    %2143 = vmatpush2.msra.mxu0 0.0
    %2144 = vmatprep.mubr.f32.mxu0 0.0
    %2145 = vmatmul.mubr.f32.gmra.mxu0 %v2078
    %v2146 = vpop.f32.mrf.mxu0
    %v2147 = vadd.f32 0.0, %v2146
    %v2148 = vpop.f32.mrf.mxu0
    %2149 = vdwg.mxu0
    %v2151 = vsel %vm1073, %v1780, 0
    %2153 = vmatprep.subr.mxu0 0.0
    %2154 = vmatpush1.msra.mxu0 0.0
    %2155 = vmatprep.subr.mxu0 0.0
    %2156 = vmatpush1.msra.mxu0 0.0
    %2157 = vmatprep.subr.mxu0 0.0
    %2158 = vmatpush1.msra.mxu0 0.0
    %2159 = vmatprep.subr.mxu0 0.0
    %2160 = vmatpush1.msra.mxu0 0.0
    %2161 = vmatprep.subr.mxu0 0.0
    %2162 = vmatpush1.msra.mxu0 0.0
    %2163 = vmatprep.subr.mxu0 0.0
    %2164 = vmatpush1.msra.mxu0 0.0
    %2165 = vmatprep.subr.mxu0 0.0
    %2166 = vmatpush1.msra.mxu0 0.0
    %2167 = vmatprep.subr.mxu0 0.0
    %2168 = vmatpush1.msra.mxu0 0.0
    %2169 = vmatprep.subr.mxu0 0.0
    %2170 = vmatpush1.msra.mxu0 0.0
    %2171 = vmatprep.subr.mxu0 0.0
    %2172 = vmatpush1.msra.mxu0 0.0
    %2173 = vmatprep.subr.mxu0 0.0
    %2174 = vmatpush1.msra.mxu0 0.0
    %2175 = vmatprep.subr.mxu0 0.0
    %2176 = vmatpush1.msra.mxu0 0.0
    %2177 = vmatprep.subr.mxu0 0.0
    %2178 = vmatpush1.msra.mxu0 0.0
    %2179 = vmatprep.subr.mxu0 0.0
    %2180 = vmatpush1.msra.mxu0 0.0
    %2181 = vmatprep.subr.mxu0 0.0
    %2182 = vmatpush1.msra.mxu0 0.0
    %2183 = vmatprep.subr.mxu0 0.0
    %2184 = vmatpush1.msra.mxu0 %v1070
    %2185 = vmatprep.subr.mxu0 0.0
    %2186 = vmatpush2.msra.mxu0 0.0
    %2187 = vmatprep.subr.mxu0 0.0
    %2188 = vmatpush2.msra.mxu0 0.0
    %2189 = vmatprep.subr.mxu0 0.0
    %2190 = vmatpush2.msra.mxu0 0.0
    %2191 = vmatprep.subr.mxu0 0.0
    %2192 = vmatpush2.msra.mxu0 0.0
    %2193 = vmatprep.subr.mxu0 0.0
    %2194 = vmatpush2.msra.mxu0 0.0
    %2195 = vmatprep.subr.mxu0 0.0
    %2196 = vmatpush2.msra.mxu0 0.0
    %2197 = vmatprep.subr.mxu0 0.0
    %2198 = vmatpush2.msra.mxu0 0.0
    %2199 = vmatprep.subr.mxu0 0.0
    %2200 = vmatpush2.msra.mxu0 0.0
    %2201 = vmatprep.subr.mxu0 0.0
    %2202 = vmatpush2.msra.mxu0 0.0
    %2203 = vmatprep.subr.mxu0 0.0
    %2204 = vmatpush2.msra.mxu0 0.0
    %2205 = vmatprep.subr.mxu0 0.0
    %2206 = vmatpush2.msra.mxu0 0.0
    %2207 = vmatprep.subr.mxu0 0.0
    %2208 = vmatpush2.msra.mxu0 0.0
    %2209 = vmatprep.subr.mxu0 0.0
    %2210 = vmatpush2.msra.mxu0 0.0
    %2211 = vmatprep.subr.mxu0 0.0
    %2212 = vmatpush2.msra.mxu0 0.0
    %2213 = vmatprep.subr.mxu0 0.0
    %2214 = vmatpush2.msra.mxu0 0.0
    %2215 = vmatprep.subr.mxu0 0.0
    %2216 = vmatpush2.msra.mxu0 0.0
    %2217 = vmatprep.mubr.f32.mxu0 0.0
    %2218 = vmatmul.mubr.f32.gmra.mxu0 %v2151
    %v2219 = vpop.f32.mrf.mxu0
    %v2220 = vadd.f32 0.0, %v2219
    %v2221 = vpop.f32.mrf.mxu0
    %2222 = vdwg.mxu0
    %v2224 = vsel %vm1073, %v1782, 0
    %2226 = vmatprep.subr.mxu0 0.0
    %2227 = vmatpush1.msra.mxu0 0.0
    %2228 = vmatprep.subr.mxu0 0.0
    %2229 = vmatpush1.msra.mxu0 0.0
    %2230 = vmatprep.subr.mxu0 0.0
    %2231 = vmatpush1.msra.mxu0 0.0
    %2232 = vmatprep.subr.mxu0 0.0
    %2233 = vmatpush1.msra.mxu0 0.0
    %2234 = vmatprep.subr.mxu0 0.0
    %2235 = vmatpush1.msra.mxu0 0.0
    %2236 = vmatprep.subr.mxu0 0.0
    %2237 = vmatpush1.msra.mxu0 0.0
    %2238 = vmatprep.subr.mxu0 0.0
    %2239 = vmatpush1.msra.mxu0 0.0
    %2240 = vmatprep.subr.mxu0 0.0
    %2241 = vmatpush1.msra.mxu0 0.0
    %2242 = vmatprep.subr.mxu0 0.0
    %2243 = vmatpush1.msra.mxu0 0.0
    %2244 = vmatprep.subr.mxu0 0.0
    %2245 = vmatpush1.msra.mxu0 0.0
    %2246 = vmatprep.subr.mxu0 0.0
    %2247 = vmatpush1.msra.mxu0 0.0
    %2248 = vmatprep.subr.mxu0 0.0
    %2249 = vmatpush1.msra.mxu0 0.0
    %2250 = vmatprep.subr.mxu0 0.0
    %2251 = vmatpush1.msra.mxu0 0.0
    %2252 = vmatprep.subr.mxu0 0.0
    %2253 = vmatpush1.msra.mxu0 0.0
    %2254 = vmatprep.subr.mxu0 0.0
    %2255 = vmatpush1.msra.mxu0 0.0
    %2256 = vmatprep.subr.mxu0 0.0
    %2257 = vmatpush1.msra.mxu0 %v1071
    %2258 = vmatprep.subr.mxu0 0.0
    %2259 = vmatpush2.msra.mxu0 0.0
    %2260 = vmatprep.subr.mxu0 0.0
    %2261 = vmatpush2.msra.mxu0 0.0
    %2262 = vmatprep.subr.mxu0 0.0
    %2263 = vmatpush2.msra.mxu0 0.0
    %2264 = vmatprep.subr.mxu0 0.0
    %2265 = vmatpush2.msra.mxu0 0.0
    %2266 = vmatprep.subr.mxu0 0.0
    %2267 = vmatpush2.msra.mxu0 0.0
    %2268 = vmatprep.subr.mxu0 0.0
    %2269 = vmatpush2.msra.mxu0 0.0
    %2270 = vmatprep.subr.mxu0 0.0
    %2271 = vmatpush2.msra.mxu0 0.0
    %2272 = vmatprep.subr.mxu0 0.0
    %2273 = vmatpush2.msra.mxu0 0.0
    %2274 = vmatprep.subr.mxu0 0.0
    %2275 = vmatpush2.msra.mxu0 0.0
    %2276 = vmatprep.subr.mxu0 0.0
    %2277 = vmatpush2.msra.mxu0 0.0
    %2278 = vmatprep.subr.mxu0 0.0
    %2279 = vmatpush2.msra.mxu0 0.0
    %2280 = vmatprep.subr.mxu0 0.0
    %2281 = vmatpush2.msra.mxu0 0.0
    %2282 = vmatprep.subr.mxu0 0.0
    %2283 = vmatpush2.msra.mxu0 0.0
    %2284 = vmatprep.subr.mxu0 0.0
    %2285 = vmatpush2.msra.mxu0 0.0
    %2286 = vmatprep.subr.mxu0 0.0
    %2287 = vmatpush2.msra.mxu0 0.0
    %2288 = vmatprep.subr.mxu0 0.0
    %2289 = vmatpush2.msra.mxu0 0.0
    %2290 = vmatprep.mubr.f32.mxu0 0.0
    %2291 = vmatmul.mubr.f32.gmra.mxu0 %v2224
    %v2292 = vpop.f32.mrf.mxu0
    %v2293 = vadd.f32 0.0, %v2292
    %v2294 = vpop.f32.mrf.mxu0
    %2295 = vdwg.mxu0
    %v2297 = vsel %vm1073, %v1784, 0
    %2299 = vmatprep.subr.mxu0 0.0
    %2300 = vmatpush1.msra.mxu0 0.0
    %2301 = vmatprep.subr.mxu0 0.0
    %2302 = vmatpush1.msra.mxu0 0.0
    %2303 = vmatprep.subr.mxu0 0.0
    %2304 = vmatpush1.msra.mxu0 0.0
    %2305 = vmatprep.subr.mxu0 0.0
    %2306 = vmatpush1.msra.mxu0 0.0
    %2307 = vmatprep.subr.mxu0 0.0
    %2308 = vmatpush1.msra.mxu0 0.0
    %2309 = vmatprep.subr.mxu0 0.0
    %2310 = vmatpush1.msra.mxu0 0.0
    %2311 = vmatprep.subr.mxu0 0.0
    %2312 = vmatpush1.msra.mxu0 0.0
    %2313 = vmatprep.subr.mxu0 0.0
    %2314 = vmatpush1.msra.mxu0 0.0
    %2315 = vmatprep.subr.mxu0 0.0
    %2316 = vmatpush1.msra.mxu0 0.0
    %2317 = vmatprep.subr.mxu0 0.0
    %2318 = vmatpush1.msra.mxu0 0.0
    %2319 = vmatprep.subr.mxu0 0.0
    %2320 = vmatpush1.msra.mxu0 0.0
    %2321 = vmatprep.subr.mxu0 0.0
    %2322 = vmatpush1.msra.mxu0 0.0
    %2323 = vmatprep.subr.mxu0 0.0
    %2324 = vmatpush1.msra.mxu0 0.0
    %2325 = vmatprep.subr.mxu0 0.0
    %2326 = vmatpush1.msra.mxu0 0.0
    %2327 = vmatprep.subr.mxu0 0.0
    %2328 = vmatpush1.msra.mxu0 0.0
    %2329 = vmatprep.subr.mxu0 0.0
    %2330 = vmatpush1.msra.mxu0 %v1072
    %2331 = vmatprep.subr.mxu0 0.0
    %2332 = vmatpush2.msra.mxu0 0.0
    %2333 = vmatprep.subr.mxu0 0.0
    %2334 = vmatpush2.msra.mxu0 0.0
    %2335 = vmatprep.subr.mxu0 0.0
    %2336 = vmatpush2.msra.mxu0 0.0
    %2337 = vmatprep.subr.mxu0 0.0
    %2338 = vmatpush2.msra.mxu0 0.0
    %2339 = vmatprep.subr.mxu0 0.0
    %2340 = vmatpush2.msra.mxu0 0.0
    %2341 = vmatprep.subr.mxu0 0.0
    %2342 = vmatpush2.msra.mxu0 0.0
    %2343 = vmatprep.subr.mxu0 0.0
    %2344 = vmatpush2.msra.mxu0 0.0
    %2345 = vmatprep.subr.mxu0 0.0
    %2346 = vmatpush2.msra.mxu0 0.0
    %2347 = vmatprep.subr.mxu0 0.0
    %2348 = vmatpush2.msra.mxu0 0.0
    %2349 = vmatprep.subr.mxu0 0.0
    %2350 = vmatpush2.msra.mxu0 0.0
    %2351 = vmatprep.subr.mxu0 0.0
    %2352 = vmatpush2.msra.mxu0 0.0
    %2353 = vmatprep.subr.mxu0 0.0
    %2354 = vmatpush2.msra.mxu0 0.0
    %2355 = vmatprep.subr.mxu0 0.0
    %2356 = vmatpush2.msra.mxu0 0.0
    %2357 = vmatprep.subr.mxu0 0.0
    %2358 = vmatpush2.msra.mxu0 0.0
    %2359 = vmatprep.subr.mxu0 0.0
    %2360 = vmatpush2.msra.mxu0 0.0
    %2361 = vmatprep.subr.mxu0 0.0
    %2362 = vmatpush2.msra.mxu0 0.0
    %2363 = vmatprep.mubr.f32.mxu0 0.0
    %2364 = vmatmul.mubr.f32.gmra.mxu0 %v2297
    %v2365 = vpop.f32.mrf.mxu0
    %v2366 = vadd.f32 0.0, %v2365
    %v2367 = vpop.f32.mrf.mxu0
    %2368 = vdwg.mxu0
    %v2369 = vcombine.low %v1855, %v2001
    %v2370 = vcombine.high %v1855, %v2001
    %v2372 = vunpack.c.l.s4 1983009808
    %v2373 = vunpack.c.0.s8 %v2372
    %v2374 = vlaneseq
    %v2375 = vshrl.u32 %v2374, 7
    %v2376 = vsub.s32 %v2373, %v2375
    %v2377 = vrot.slane %v2369, %v2376
    %v2379 = vunpack.c.l.s4 1983009808
    %v2380 = vunpack.c.0.s8 %v2379
    %v2381 = vlaneseq
    %v2382 = vshrl.u32 %v2381, 7
    %v2383 = vsub.s32 %v2380, %v2382
    %v2384 = vrot.slane %v2370, %v2383
    %v2385 = vcombine.low %v1928, %v2074
    %v2386 = vcombine.high %v1928, %v2074
    %v2388 = vunpack.c.l.s4 1983009808
    %v2389 = vunpack.c.0.s8 %v2388
    %v2390 = vlaneseq
    %v2391 = vshrl.u32 %v2390, 7
    %v2392 = vsub.s32 %v2389, %v2391
    %v2393 = vrot.slane %v2385, %v2392
    %v2395 = vunpack.c.l.s4 1983009808
    %v2396 = vunpack.c.0.s8 %v2395
    %v2397 = vlaneseq
    %v2398 = vshrl.u32 %v2397, 7
    %v2399 = vsub.s32 %v2396, %v2398
    %v2400 = vrot.slane %v2386, %v2399
    %v2401 = vcombine.low %v2377, %v2393
    %v2402 = vcombine.high %v2377, %v2393
    %v2404 = vunpack.c.l.s4 1934713408
    %v2405 = vunpack.c.0.s8 %v2404
    %v2406 = vlaneseq
    %v2407 = vshrl.u32 %v2406, 7
    %v2408 = vsub.s32 %v2405, %v2407
    %v2409 = vrot.slane %v2401, %v2408
    %v2411 = vunpack.c.l.s4 1934713408
    %v2412 = vunpack.c.0.s8 %v2411
    %v2413 = vlaneseq
    %v2414 = vshrl.u32 %v2413, 7
    %v2415 = vsub.s32 %v2412, %v2414
    %v2416 = vrot.slane %v2402, %v2415
    %v2417 = vcombine.low %v2384, %v2400
    %v2418 = vcombine.high %v2384, %v2400
    %v2420 = vunpack.c.l.s4 1934713408
    %v2421 = vunpack.c.0.s8 %v2420
    %v2422 = vlaneseq
    %v2423 = vshrl.u32 %v2422, 7
    %v2424 = vsub.s32 %v2421, %v2423
    %v2425 = vrot.slane %v2417, %v2424
    %v2427 = vunpack.c.l.s4 1934713408
    %v2428 = vunpack.c.0.s8 %v2427
    %v2429 = vlaneseq
    %v2430 = vshrl.u32 %v2429, 7
    %v2431 = vsub.s32 %v2428, %v2430
    %v2432 = vrot.slane %v2418, %v2431
    %v2433 = vcombine.high %v2409, 0.0
    %v2434 = vcombine.high %v2416, 0.0
    %v2435 = vcombine.high %v2425, 0.0
    %v2436 = vcombine.high %v2432, 0.0
    %v2437 = vcombine.low %v2147, %v2293
    %v2438 = vcombine.high %v2147, %v2293
    %v2440 = vunpack.c.l.s4 1983009808
    %v2441 = vunpack.c.0.s8 %v2440
    %v2442 = vlaneseq
    %v2443 = vshrl.u32 %v2442, 7
    %v2444 = vsub.s32 %v2441, %v2443
    %v2445 = vrot.slane %v2437, %v2444
    %v2447 = vunpack.c.l.s4 1983009808
    %v2448 = vunpack.c.0.s8 %v2447
    %v2449 = vlaneseq
    %v2450 = vshrl.u32 %v2449, 7
    %v2451 = vsub.s32 %v2448, %v2450
    %v2452 = vrot.slane %v2438, %v2451
    %v2453 = vcombine.low %v2220, %v2366
    %v2454 = vcombine.high %v2220, %v2366
    %v2456 = vunpack.c.l.s4 1983009808
    %v2457 = vunpack.c.0.s8 %v2456
    %v2458 = vlaneseq
    %v2459 = vshrl.u32 %v2458, 7
    %v2460 = vsub.s32 %v2457, %v2459
    %v2461 = vrot.slane %v2453, %v2460
    %v2463 = vunpack.c.l.s4 1983009808
    %v2464 = vunpack.c.0.s8 %v2463
    %v2465 = vlaneseq
    %v2466 = vshrl.u32 %v2465, 7
    %v2467 = vsub.s32 %v2464, %v2466
    %v2468 = vrot.slane %v2454, %v2467
    %v2469 = vcombine.low %v2445, %v2461
    %v2470 = vcombine.high %v2445, %v2461
    %v2472 = vunpack.c.l.s4 1934713408
    %v2473 = vunpack.c.0.s8 %v2472
    %v2474 = vlaneseq
    %v2475 = vshrl.u32 %v2474, 7
    %v2476 = vsub.s32 %v2473, %v2475
    %v2477 = vrot.slane %v2469, %v2476
    %v2479 = vunpack.c.l.s4 1934713408
    %v2480 = vunpack.c.0.s8 %v2479
    %v2481 = vlaneseq
    %v2482 = vshrl.u32 %v2481, 7
    %v2483 = vsub.s32 %v2480, %v2482
    %v2484 = vrot.slane %v2470, %v2483
    %v2485 = vcombine.low %v2452, %v2468
    %v2486 = vcombine.high %v2452, %v2468
    %v2488 = vunpack.c.l.s4 1934713408
    %v2489 = vunpack.c.0.s8 %v2488
    %v2490 = vlaneseq
    %v2491 = vshrl.u32 %v2490, 7
    %v2492 = vsub.s32 %v2489, %v2491
    %v2493 = vrot.slane %v2485, %v2492
    %v2495 = vunpack.c.l.s4 1934713408
    %v2496 = vunpack.c.0.s8 %v2495
    %v2497 = vlaneseq
    %v2498 = vshrl.u32 %v2497, 7
    %v2499 = vsub.s32 %v2496, %v2498
    %v2500 = vrot.slane %v2486, %v2499
    %v2501 = vcombine.high %v2477, 0.0
    %v2502 = vcombine.high %v2484, 0.0
    %v2503 = vcombine.high %v2493, 0.0
    %v2504 = vcombine.high %v2500, 0.0
    %v2505 = vcombine.low %v2409, %v2416
    %v2507 = vunpack.c.l.s4 1983009808
    %v2508 = vunpack.c.0.s8 %v2507
    %v2509 = vlaneseq
    %v2510 = vshrl.u32 %v2509, 7
    %v2511 = vsub.s32 %v2508, %v2510
    %v2512 = vrot.slane %v2505, %v2511
    %v2513 = vcombine.low %v2433, %v2434
    %v2515 = vunpack.c.l.s4 1983009808
    %v2516 = vunpack.c.0.s8 %v2515
    %v2517 = vlaneseq
    %v2518 = vshrl.u32 %v2517, 7
    %v2519 = vsub.s32 %v2516, %v2518
    %v2520 = vrot.slane %v2513, %v2519
    %v2521 = vcombine.low %v2425, %v2432
    %v2523 = vunpack.c.l.s4 1983009808
    %v2524 = vunpack.c.0.s8 %v2523
    %v2525 = vlaneseq
    %v2526 = vshrl.u32 %v2525, 7
    %v2527 = vsub.s32 %v2524, %v2526
    %v2528 = vrot.slane %v2521, %v2527
    %v2529 = vcombine.low %v2435, %v2436
    %v2531 = vunpack.c.l.s4 1983009808
    %v2532 = vunpack.c.0.s8 %v2531
    %v2533 = vlaneseq
    %v2534 = vshrl.u32 %v2533, 7
    %v2535 = vsub.s32 %v2532, %v2534
    %v2536 = vrot.slane %v2529, %v2535
    %v2537 = vcombine.low %v2512, %v2520
    %v2538 = vcombine.high %v2512, %v2520
    %v2540 = vunpack.c.l.s4 1934713408
    %v2541 = vunpack.c.0.s8 %v2540
    %v2542 = vlaneseq
    %v2543 = vshrl.u32 %v2542, 7
    %v2544 = vsub.s32 %v2541, %v2543
    %v2545 = vrot.slane %v2537, %v2544
    %v2547 = vunpack.c.l.s4 1934713408
    %v2548 = vunpack.c.0.s8 %v2547
    %v2549 = vlaneseq
    %v2550 = vshrl.u32 %v2549, 7
    %v2551 = vsub.s32 %v2548, %v2550
    %v2552 = vrot.slane %v2538, %v2551
    %v2553 = vcombine.low %v2528, %v2536
    %v2554 = vcombine.high %v2528, %v2536
    %v2556 = vunpack.c.l.s4 1934713408
    %v2557 = vunpack.c.0.s8 %v2556
    %v2558 = vlaneseq
    %v2559 = vshrl.u32 %v2558, 7
    %v2560 = vsub.s32 %v2557, %v2559
    %v2561 = vrot.slane %v2553, %v2560
    %v2563 = vunpack.c.l.s4 1934713408
    %v2564 = vunpack.c.0.s8 %v2563
    %v2565 = vlaneseq
    %v2566 = vshrl.u32 %v2565, 7
    %v2567 = vsub.s32 %v2564, %v2566
    %v2568 = vrot.slane %v2554, %v2567
    %v2569 = vcombine.low %v2545, %v2561
    %v2570 = vcombine.high %v2545, %v2561
    %v2571 = vcombine.low %v2552, %v2568
    %v2572 = vcombine.high %v2552, %v2568
    %v2573 = vcombine.low %v2477, %v2484
    %v2575 = vunpack.c.l.s4 1983009808
    %v2576 = vunpack.c.0.s8 %v2575
    %v2577 = vlaneseq
    %v2578 = vshrl.u32 %v2577, 7
    %v2579 = vsub.s32 %v2576, %v2578
    %v2580 = vrot.slane %v2573, %v2579
    %v2581 = vcombine.low %v2501, %v2502
    %v2583 = vunpack.c.l.s4 1983009808
    %v2584 = vunpack.c.0.s8 %v2583
    %v2585 = vlaneseq
    %v2586 = vshrl.u32 %v2585, 7
    %v2587 = vsub.s32 %v2584, %v2586
    %v2588 = vrot.slane %v2581, %v2587
    %v2589 = vcombine.low %v2493, %v2500
    %v2591 = vunpack.c.l.s4 1983009808
    %v2592 = vunpack.c.0.s8 %v2591
    %v2593 = vlaneseq
    %v2594 = vshrl.u32 %v2593, 7
    %v2595 = vsub.s32 %v2592, %v2594
    %v2596 = vrot.slane %v2589, %v2595
    %v2597 = vcombine.low %v2503, %v2504
    %v2599 = vunpack.c.l.s4 1983009808
    %v2600 = vunpack.c.0.s8 %v2599
    %v2601 = vlaneseq
    %v2602 = vshrl.u32 %v2601, 7
    %v2603 = vsub.s32 %v2600, %v2602
    %v2604 = vrot.slane %v2597, %v2603
    %v2605 = vcombine.low %v2580, %v2588
    %v2606 = vcombine.high %v2580, %v2588
    %v2608 = vunpack.c.l.s4 1934713408
    %v2609 = vunpack.c.0.s8 %v2608
    %v2610 = vlaneseq
    %v2611 = vshrl.u32 %v2610, 7
    %v2612 = vsub.s32 %v2609, %v2611
    %v2613 = vrot.slane %v2605, %v2612
    %v2615 = vunpack.c.l.s4 1934713408
    %v2616 = vunpack.c.0.s8 %v2615
    %v2617 = vlaneseq
    %v2618 = vshrl.u32 %v2617, 7
    %v2619 = vsub.s32 %v2616, %v2618
    %v2620 = vrot.slane %v2606, %v2619
    %v2621 = vcombine.low %v2596, %v2604
    %v2622 = vcombine.high %v2596, %v2604
    %v2624 = vunpack.c.l.s4 1934713408
    %v2625 = vunpack.c.0.s8 %v2624
    %v2626 = vlaneseq
    %v2627 = vshrl.u32 %v2626, 7
    %v2628 = vsub.s32 %v2625, %v2627
    %v2629 = vrot.slane %v2621, %v2628
    %v2631 = vunpack.c.l.s4 1934713408
    %v2632 = vunpack.c.0.s8 %v2631
    %v2633 = vlaneseq
    %v2634 = vshrl.u32 %v2633, 7
    %v2635 = vsub.s32 %v2632, %v2634
    %v2636 = vrot.slane %v2622, %v2635
    %v2637 = vcombine.low %v2613, %v2629
    %v2638 = vcombine.high %v2613, %v2629
    %v2639 = vcombine.low %v2620, %v2636
    %v2640 = vcombine.high %v2620, %v2636
    %2643 = vrot.lane.b32.xlu0 %v2570, 8
    %v2644 = vpop.permute.xlu0 %2643
    %2645 = vrot.lane.b32.xlu0 %v2638, 8
    %v2646 = vpop.permute.xlu0 %2645
    %2651 = vrot.lane.b32.xlu0 %v2571, 16
    %v2652 = vpop.permute.xlu0 %2651
    %2653 = vrot.lane.b32.xlu0 %v2639, 16
    %v2654 = vpop.permute.xlu0 %2653
    %2659 = vrot.lane.b32.xlu0 %v2572, 24
    %v2660 = vpop.permute.xlu0 %2659
    %2661 = vrot.lane.b32.xlu0 %v2640, 24
    %v2662 = vpop.permute.xlu0 %2661
    %v2665 = vsel %vm1073, %v2569, %v2644
    %v2666 = vsel %vm1073, %v2637, %v2646
    %vm2667 = vcmask 130048
    %v2668 = vsel %vm2667, %v2665, %v2652
    %v2669 = vsel %vm2667, %v2666, %v2654
    %vm2670 = vcmask 195584
    %v2671 = vsel %vm2670, %v2668, %v2660
    %v2672 = vsel %vm2670, %v2669, %v2662
    %v2674 = vsel %vm74, %v2671, 0
    %v2677 = vsel %vm74, %v2672, 0
    %2679 = vmatprep.subr.mxu0 0.0
    %2680 = vmatpush1.msra.mxu0 0.0
    %2681 = vmatprep.subr.mxu0 0.0
    %2682 = vmatpush1.msra.mxu0 0.0
    %2683 = vmatprep.subr.mxu0 0.0
    %2684 = vmatpush1.msra.mxu0 0.0
    %2685 = vmatprep.subr.mxu0 0.0
    %2686 = vmatpush1.msra.mxu0 0.0
    %2687 = vmatprep.subr.mxu0 0.0
    %2688 = vmatpush1.msra.mxu0 0.0
    %2689 = vmatprep.subr.mxu0 0.0
    %2690 = vmatpush1.msra.mxu0 0.0
    %2691 = vmatprep.subr.mxu0 0.0
    %2692 = vmatpush1.msra.mxu0 0.0
    %2693 = vmatprep.subr.mxu0 0.0
    %2694 = vmatpush1.msra.mxu0 0.0
    %2695 = vmatprep.subr.mxu0 0.0
    %2696 = vmatpush1.msra.mxu0 0.0
    %2697 = vmatprep.subr.mxu0 0.0
    %2698 = vmatpush1.msra.mxu0 0.0
    %2699 = vmatprep.subr.mxu0 0.0
    %2700 = vmatpush1.msra.mxu0 0.0
    %2701 = vmatprep.subr.mxu0 0.0
    %2702 = vmatpush1.msra.mxu0 0.0
    %2703 = vmatprep.subr.mxu0 0.0
    %2704 = vmatpush1.msra.mxu0 %v53
    %2705 = vmatprep.subr.mxu0 0.0
    %2706 = vmatpush1.msra.mxu0 %v52
    %2707 = vmatprep.subr.mxu0 0.0
    %2708 = vmatpush1.msra.mxu0 %v51
    %2709 = vmatprep.subr.mxu0 0.0
    %2710 = vmatpush1.msra.mxu0 %v50
    %2711 = vmatprep.subr.mxu0 0.0
    %2712 = vmatpush2.msra.mxu0 0.0
    %2713 = vmatprep.subr.mxu0 0.0
    %2714 = vmatpush2.msra.mxu0 0.0
    %2715 = vmatprep.subr.mxu0 0.0
    %2716 = vmatpush2.msra.mxu0 0.0
    %2717 = vmatprep.subr.mxu0 0.0
    %2718 = vmatpush2.msra.mxu0 0.0
    %2719 = vmatprep.subr.mxu0 0.0
    %2720 = vmatpush2.msra.mxu0 0.0
    %2721 = vmatprep.subr.mxu0 0.0
    %2722 = vmatpush2.msra.mxu0 0.0
    %2723 = vmatprep.subr.mxu0 0.0
    %2724 = vmatpush2.msra.mxu0 0.0
    %2725 = vmatprep.subr.mxu0 0.0
    %2726 = vmatpush2.msra.mxu0 0.0
    %2727 = vmatprep.subr.mxu0 0.0
    %2728 = vmatpush2.msra.mxu0 0.0
    %2729 = vmatprep.subr.mxu0 0.0
    %2730 = vmatpush2.msra.mxu0 0.0
    %2731 = vmatprep.subr.mxu0 0.0
    %2732 = vmatpush2.msra.mxu0 0.0
    %2733 = vmatprep.subr.mxu0 0.0
    %2734 = vmatpush2.msra.mxu0 0.0
    %2735 = vmatprep.subr.mxu0 0.0
    %2736 = vmatpush2.msra.mxu0 0.0
    %2737 = vmatprep.subr.mxu0 0.0
    %2738 = vmatpush2.msra.mxu0 0.0
    %2739 = vmatprep.subr.mxu0 0.0
    %2740 = vmatpush2.msra.mxu0 0.0
    %2741 = vmatprep.subr.mxu0 0.0
    %2742 = vmatpush2.msra.mxu0 0.0
    %2743 = vmatprep.mubr.f32.mxu0 0.0
    %2744 = vmatmul.mubr.f32.gmra.mxu0 %v2674
    %v2745 = vpop.f32.mrf.mxu0
    %v2746 = vadd.f32 0.0, %v2745
    %v2747 = vpop.f32.mrf.mxu0
    %2748 = vmatprep.mubr.f32.mxu0 0.0
    %2749 = vmatmul.mubr.f32.gmra.mxu0 %v2677
    %v2750 = vpop.f32.mrf.mxu0
    %v2751 = vadd.f32 0.0, %v2750
    %v2752 = vpop.f32.mrf.mxu0
    %2753 = vdwg.mxu0
    %v2754 = vadd.f32 %v40, %v2746
    %v2755 = vadd.f32 %v41, %v2751
    %v2756 = vsel %vm74, %v2754, 0.0
    %2757 = vadd.xlane.f32.xlu0 %v2756
    %v2758 = vpop.xlane.xlu0 %2757
    %v2759 = vsel %vm74, %v2755, 0.0
    %2760 = vadd.xlane.f32.xlu0 %v2759
    %v2761 = vpop.xlane.xlu0 %2760
    %v2762 = vmul.f32 %v2758, %v81
    %v2763 = vmul.f32 %v2761, %v81
    %v2764 = vsub.f32 %v2754, %v2762
    %v2765 = vsub.f32 %v2755, %v2763
    %v2766 = vmul.f32 %v2764, %v2764
    %v2767 = vmul.f32 %v2765, %v2765
    %v2768 = vsel %vm74, %v2766, 0.0
    %2769 = vadd.xlane.f32.xlu0 %v2768
    %v2770 = vpop.xlane.xlu0 %2769
    %v2771 = vsel %vm74, %v2767, 0.0
    %2772 = vadd.xlane.f32.xlu0 %v2771
    %v2773 = vpop.xlane.xlu0 %2772
    %v2774 = vmul.f32 %v2770, %v81
    %v2775 = vmul.f32 %v2773, %v81
    %v2776 = vadd.f32 %v2774, 1e-05
    %v2777 = vadd.f32 %v2775, 1e-05
    %v2778 = vrsqrt.pop %v2776
    %v2779 = vrsqrt.pop %v2777
    %v2780 = vmul.f32 %v2764, %v2778
    %v2781 = vmul.f32 %v2765, %v2779
    %v2782 = vlaneseq
    %v2783 = vshrl.u32 %v2782, 7
    %v2784 = vsub.s32 0, %v2783
    %v2785 = vrot.slane %v43, %v2784
    %v2786 = vmul.f32 %v2780, %v2785
    %v2787 = vmul.f32 %v2781, %v2785
    %v2788 = vlaneseq
    %v2789 = vshrl.u32 %v2788, 7
    %v2790 = vsub.s32 0, %v2789
    %v2791 = vrot.slane %v44, %v2790
    %v2793 = vsel %vm74, %v2786, 0
    %v2796 = vsel %vm74, %v2787, 0
    %2798 = vmatprep.subr.mxu0 0.0
    %2799 = vmatpush1.msra.mxu0 0.0
    %2800 = vmatprep.subr.mxu0 0.0
    %2801 = vmatpush1.msra.mxu0 0.0
    %2802 = vmatprep.subr.mxu0 0.0
    %2803 = vmatpush1.msra.mxu0 0.0
    %2804 = vmatprep.subr.mxu0 0.0
    %2805 = vmatpush1.msra.mxu0 0.0
    %2806 = vmatprep.subr.mxu0 0.0
    %2807 = vmatpush1.msra.mxu0 0.0
    %2808 = vmatprep.subr.mxu0 0.0
    %2809 = vmatpush1.msra.mxu0 0.0
    %2810 = vmatprep.subr.mxu0 0.0
    %2811 = vmatpush1.msra.mxu0 0.0
    %2812 = vmatprep.subr.mxu0 0.0
    %2813 = vmatpush1.msra.mxu0 0.0
    %2814 = vmatprep.subr.mxu0 0.0
    %2815 = vmatpush1.msra.mxu0 0.0
    %2816 = vmatprep.subr.mxu0 0.0
    %2817 = vmatpush1.msra.mxu0 0.0
    %2818 = vmatprep.subr.mxu0 0.0
    %2819 = vmatpush1.msra.mxu0 0.0
    %2820 = vmatprep.subr.mxu0 0.0
    %2821 = vmatpush1.msra.mxu0 0.0
    %2822 = vmatprep.subr.mxu0 0.0
    %2823 = vmatpush1.msra.mxu0 %v57
    %2824 = vmatprep.subr.mxu0 0.0
    %2825 = vmatpush1.msra.mxu0 %v56
    %2826 = vmatprep.subr.mxu0 0.0
    %2827 = vmatpush1.msra.mxu0 %v55
    %2828 = vmatprep.subr.mxu0 0.0
    %2829 = vmatpush1.msra.mxu0 %v54
    %2830 = vmatprep.subr.mxu0 0.0
    %2831 = vmatpush2.msra.mxu0 0.0
    %2832 = vmatprep.subr.mxu0 0.0
    %2833 = vmatpush2.msra.mxu0 0.0
    %2834 = vmatprep.subr.mxu0 0.0
    %2835 = vmatpush2.msra.mxu0 0.0
    %2836 = vmatprep.subr.mxu0 0.0
    %2837 = vmatpush2.msra.mxu0 0.0
    %2838 = vmatprep.subr.mxu0 0.0
    %2839 = vmatpush2.msra.mxu0 0.0
    %2840 = vmatprep.subr.mxu0 0.0
    %2841 = vmatpush2.msra.mxu0 0.0
    %2842 = vmatprep.subr.mxu0 0.0
    %2843 = vmatpush2.msra.mxu0 0.0
    %2844 = vmatprep.subr.mxu0 0.0
    %2845 = vmatpush2.msra.mxu0 0.0
    %2846 = vmatprep.subr.mxu0 0.0
    %2847 = vmatpush2.msra.mxu0 0.0
    %2848 = vmatprep.subr.mxu0 0.0
    %2849 = vmatpush2.msra.mxu0 0.0
    %2850 = vmatprep.subr.mxu0 0.0
    %2851 = vmatpush2.msra.mxu0 0.0
    %2852 = vmatprep.subr.mxu0 0.0
    %2853 = vmatpush2.msra.mxu0 0.0
    %2854 = vmatprep.subr.mxu0 0.0
    %2855 = vmatpush2.msra.mxu0 0.0
    %2856 = vmatprep.subr.mxu0 0.0
    %2857 = vmatpush2.msra.mxu0 0.0
    %2858 = vmatprep.subr.mxu0 0.0
    %2859 = vmatpush2.msra.mxu0 0.0
    %2860 = vmatprep.subr.mxu0 0.0
    %2861 = vmatpush2.msra.mxu0 0.0
    %2862 = vmatprep.mubr.f32.mxu0 0.0
    %2863 = vmatmul.mubr.f32.gmra.mxu0 %v2793
    %v2864 = vpop.f32.mrf.mxu0
    %v2865 = vadd.f32 %v2791, %v2864
    %v2866 = vpop.f32.mrf.mxu0
    %2867 = vmatprep.mubr.f32.mxu0 0.0
    %2868 = vmatmul.mubr.f32.gmra.mxu0 %v2796
    %v2869 = vpop.f32.mrf.mxu0
    %v2870 = vadd.f32 %v2791, %v2869
    %v2871 = vpop.f32.mrf.mxu0
    %2872 = vdwg.mxu0
    %v2873 = vmul.f32 %v2865, 0.5
    %v2874 = vmul.f32 %v2870, 0.5
    %v2875 = vmul.f32 %v2865, 0.70710677
    %v2876 = vmul.f32 %v2870, 0.70710677
    %v2877 = verf.f32.pop %v2875
    %v2878 = verf.f32.pop %v2876
    %v2879 = vadd.f32 %v2877, 1.0
    %v2880 = vadd.f32 %v2878, 1.0
    %v2881 = vmul.f32 %v2873, %v2879
    %v2882 = vmul.f32 %v2874, %v2880
    %v2883 = vlaneseq
    %v2884 = vshrl.u32 %v2883, 7
    %v2885 = vsub.s32 0, %v2884
    %v2886 = vrot.slane %v45, %v2885
    %2887 = vmatprep.subr.mxu0 0.0
    %2888 = vmatpush1.msra.mxu0 %v73
    %2889 = vmatprep.subr.mxu0 0.0
    %2890 = vmatpush1.msra.mxu0 %v72
    %2891 = vmatprep.subr.mxu0 0.0
    %2892 = vmatpush1.msra.mxu0 %v71
    %2893 = vmatprep.subr.mxu0 0.0
    %2894 = vmatpush1.msra.mxu0 %v70
    %2895 = vmatprep.subr.mxu0 0.0
    %2896 = vmatpush1.msra.mxu0 %v69
    %2897 = vmatprep.subr.mxu0 0.0
    %2898 = vmatpush1.msra.mxu0 %v68
    %2899 = vmatprep.subr.mxu0 0.0
    %2900 = vmatpush1.msra.mxu0 %v67
    %2901 = vmatprep.subr.mxu0 0.0
    %2902 = vmatpush1.msra.mxu0 %v66
    %2903 = vmatprep.subr.mxu0 0.0
    %2904 = vmatpush1.msra.mxu0 %v65
    %2905 = vmatprep.subr.mxu0 0.0
    %2906 = vmatpush1.msra.mxu0 %v64
    %2907 = vmatprep.subr.mxu0 0.0
    %2908 = vmatpush1.msra.mxu0 %v63
    %2909 = vmatprep.subr.mxu0 0.0
    %2910 = vmatpush1.msra.mxu0 %v62
    %2911 = vmatprep.subr.mxu0 0.0
    %2912 = vmatpush1.msra.mxu0 %v61
    %2913 = vmatprep.subr.mxu0 0.0
    %2914 = vmatpush1.msra.mxu0 %v60
    %2915 = vmatprep.subr.mxu0 0.0
    %2916 = vmatpush1.msra.mxu0 %v59
    %2917 = vmatprep.subr.mxu0 0.0
    %2918 = vmatpush1.msra.mxu0 %v58
    %2919 = vmatprep.subr.mxu0 0.0
    %2920 = vmatpush2.msra.mxu0 0.0
    %2921 = vmatprep.subr.mxu0 0.0
    %2922 = vmatpush2.msra.mxu0 0.0
    %2923 = vmatprep.subr.mxu0 0.0
    %2924 = vmatpush2.msra.mxu0 0.0
    %2925 = vmatprep.subr.mxu0 0.0
    %2926 = vmatpush2.msra.mxu0 0.0
    %2927 = vmatprep.subr.mxu0 0.0
    %2928 = vmatpush2.msra.mxu0 0.0
    %2929 = vmatprep.subr.mxu0 0.0
    %2930 = vmatpush2.msra.mxu0 0.0
    %2931 = vmatprep.subr.mxu0 0.0
    %2932 = vmatpush2.msra.mxu0 0.0
    %2933 = vmatprep.subr.mxu0 0.0
    %2934 = vmatpush2.msra.mxu0 0.0
    %2935 = vmatprep.subr.mxu0 0.0
    %2936 = vmatpush2.msra.mxu0 0.0
    %2937 = vmatprep.subr.mxu0 0.0
    %2938 = vmatpush2.msra.mxu0 0.0
    %2939 = vmatprep.subr.mxu0 0.0
    %2940 = vmatpush2.msra.mxu0 0.0
    %2941 = vmatprep.subr.mxu0 0.0
    %2942 = vmatpush2.msra.mxu0 0.0
    %2943 = vmatprep.subr.mxu0 0.0
    %2944 = vmatpush2.msra.mxu0 0.0
    %2945 = vmatprep.subr.mxu0 0.0
    %2946 = vmatpush2.msra.mxu0 0.0
    %2947 = vmatprep.subr.mxu0 0.0
    %2948 = vmatpush2.msra.mxu0 0.0
    %2949 = vmatprep.subr.mxu0 0.0
    %2950 = vmatpush2.msra.mxu0 0.0
    %2951 = vmatprep.mubr.f32.mxu0 0.0
    %2952 = vmatmul.mubr.f32.gmra.mxu0 %v2881
    %v2953 = vpop.f32.mrf.mxu0
    %v2954 = vadd.f32 %v2886, %v2953
    %v2955 = vpop.f32.mrf.mxu0
    %2956 = vmatprep.mubr.f32.mxu0 0.0
    %2957 = vmatmul.mubr.f32.gmra.mxu0 %v2882
    %v2958 = vpop.f32.mrf.mxu0
    %v2959 = vadd.f32 %v2886, %v2958
    %v2960 = vpop.f32.mrf.mxu0
    %2961 = vdwg.mxu0
    %v2962 = vadd.f32 %v2754, %v2954
    %v2963 = vadd.f32 %v2755, %v2959
    %2964 = vst.msk [vmem:[#allocation7] sm:$0xff] %vm74, %v2962
    %2965 = vst.msk [vmem:[#allocation7 + $0x8] sm:$0xff] %vm74, %v2963
    // Predicated region
    $region18: #{tpu_custom_call.1} parent=1 // pred_check
      _
    $region19: #{tpu_custom_call.1} parent=1 // pred_check_branch
      %2967 = sbr.rel (0) target = $region21
    $region20: #{tpu_custom_call.1} parent=1 // pred_region
      %s2969 = ssub.s32 256, 256
      %2970 = vsyncadd [#allocation4], %s2969
      %s2971 = sshll.u32 [#allocation7], 4
      %s2972 = int_to_ptr.vmem [resolvable:$true] %s2971
      %2977 = dma.vmem_to_hbm [thread:$0]  %s2972, 256, %s2, [#allocation4], 128, 128, 8
    $region21: #{tpu_custom_call.1} parent=1 // pred_fallthru
      _
    // Predicated region
    $region22: #{tpu_custom_call.1} parent=1 // pred_check
      _
    $region23: #{tpu_custom_call.1} parent=1 // pred_check_branch
      %2979 = sbr.rel (0) target = $region25
    $region24: #{tpu_custom_call.1} parent=1 // pred_region
      %2980 = dma.done [#allocation4], 256
    $region25: #{tpu_custom_call.1} parent=1 // pred_fallthru
      _
    %2981 = vsyncpa [#allocation3], 1
    %2982 = vsyncpa [#allocation6], 1
    %2983 = vsyncpa [#allocation4], 1

</llo_original>
